<compile_context>
chip_gen: v5e
topology: v5e:2x2
jax: 0.10.0
libtpu: 0.0.40
codegen_flags: <defaults>
</compile_context>

<pallas_src>
import math
import functools

import jax
import jax.numpy as jnp
from jax import lax
from jax.experimental import pallas as pl
from jax.experimental.pallas import tpu as pltpu

LN_EPS = 1e-5       # PyTorch nn.LayerNorm default
NEG_BIG = -1e30     # finite "masked" bias (== -inf for partially-masked rows)
# TODO(synk): a fully-padded sequence yields a uniform attention row here, whereas
#             PyTorch nn.MultiheadAttention would produce NaN for that row.


# ----------------------------- Pallas kernel -------------------------------
def transformer_emb_kernel(x_ref, msk_ref, pe_ref,
                           wqkv_ref, bqkv_ref, wo_ref, bo_ref,
                           ln1w_ref, ln1b_ref,
                           w1_ref, b1_ref, w2_ref, b2_ref,
                           ln2w_ref, ln2b_ref,
                           o_ref, ctx_ref, *, nhead):
    tb, s, d = x_ref.shape              # (batch_block, seq, d_model)
    hd = d // nhead
    n = tb * s
    bf16 = jnp.bfloat16

    # --- scale + positional encoding (dropout = identity in eval) ------------
    x = x_ref[...].astype(jnp.float32) * jnp.float32(math.sqrt(d)) + pe_ref[...]
    xf = x.reshape(n, d)                                     # (TB*S, D), batch-major rows

    # --- fused QKV projection: bf16 operands, f32 accumulation ---------------
    qkv = jnp.dot(xf.astype(bf16), wqkv_ref[...],
                  preferred_element_type=jnp.float32) + bqkv_ref[...]

    # additive key-padding bias, computed once for all heads: (TB, 1, S)
    bias = jnp.where(msk_ref[...] > 0.5, jnp.float32(NEG_BIG), jnp.float32(0.0))

    # --- multi-head self attention -------------------------------------------
    # Heads are a short static loop; each head's context goes to a lane-contiguous
    # column slice of the VMEM scratch so the output projection is a single K=D dot.
    for h in range(nhead):                                   # static unroll
        q = qkv[:, h * hd:(h + 1) * hd].reshape(tb, s, hd).astype(bf16)
        k = qkv[:, d + h * hd:d + (h + 1) * hd].reshape(tb, s, hd).astype(bf16)
        v = qkv[:, 2 * d + h * hd:2 * d + (h + 1) * hd].reshape(tb, s, hd).astype(bf16)

        sc = jnp.einsum('bqd,bkd->bqk', q, k,
                        preferred_element_type=jnp.float32) + bias      # (TB, S, S)
        sc = sc - jnp.max(sc, axis=-1, keepdims=True)
        p = jnp.exp(sc)                                       # f32 elementwise path
        den = jnp.sum(p, axis=-1, keepdims=True)              # >= 1 always

        ctx = jnp.einsum('bqk,bkd->bqd', p.astype(bf16), v,
                         preferred_element_type=jnp.float32)            # (TB, S, hd)
        ctx = ctx / den                                       # exact softmax normalization
        ctx_ref[:, h * hd:(h + 1) * hd] = ctx.reshape(n, hd)

    # one (n, D) @ (D, D) output projection (bf16 operands, f32 accumulation)
    attn = jnp.dot(ctx_ref[...].astype(bf16), wo_ref[...],
                   preferred_element_type=jnp.float32) + bo_ref[...]

    def layer_norm(y, w, b):
        mu = jnp.mean(y, axis=-1, keepdims=True)
        var = jnp.mean((y - mu) ** 2, axis=-1, keepdims=True)
        return (y - mu) * lax.rsqrt(var + LN_EPS) * w + b

    # residual + LayerNorm1 (post-norm, PyTorch default norm_first=False)
    y = layer_norm(xf + attn, ln1w_ref[...], ln1b_ref[...])

    # feed-forward (ReLU), weights pre-transposed, bf16 operands / f32 accumulation
    h1 = jnp.maximum(
        jnp.dot(y.astype(bf16), w1_ref[...],
                preferred_element_type=jnp.float32) + b1_ref[...], 0.0)
    ff = jnp.dot(h1.astype(bf16), w2_ref[...],
                 preferred_element_type=jnp.float32) + b2_ref[...]

    z = layer_norm(y + ff, ln2w_ref[...], ln2b_ref[...])

    o_ref[...] = z.reshape(tb, s, d).astype(o_ref.dtype)


# ------------------------------ wrapper -------------------------------------
def _pick_batch_block(B, requested):
    if requested is not None:
        assert B % requested == 0
        return requested
    # default: >= 2 grid steps (software pipelining + v7x megacore) when B allows
    target = max(1, B // 4) if B >= 4 else max(1, B // 2)
    for cand in range(target, 0, -1):
        if B % cand == 0:
            return cand
    return 1


def transformer_emb_forward(src, seq_msk, params, nhead, *, batch_block=None):
    """src: (S, B, D) float32 (PyTorch seq-first); seq_msk: (B, S) bool, True = pad."""
    S, B, D = src.shape
    assert D % nhead == 0
    hd = D // nhead
    scale = 1.0 / math.sqrt(hd)
    batch_block = _pick_batch_block(B, batch_block)
    num_blocks = B // batch_block

    bf16 = jnp.bfloat16

    # batch-major layout so the kernel can run flattened (block*S, D) matmuls
    x = jnp.transpose(src, (1, 0, 2))                        # (B, S, D)
    msk = seq_msk.astype(jnp.float32).reshape(B, 1, S)       # (B, 1, S)
    pe = params["pe"][:S].astype(jnp.float32)                # (S, D)

    # pre-packed / pre-transposed weights (no in-kernel transposes), bf16 MXU operands
    wqkv_t = jnp.concatenate(
        [params["wq"] * scale, params["wk"], params["wv"]], axis=0).T.astype(bf16)  # (D, 3D)
    bqkv = jnp.concatenate(
        [params["bq"] * scale, params["bk"], params["bv"]], axis=1)                 # (1, 3D) f32
    weights = [
        wqkv_t, bqkv,
        params["wo"].T.astype(bf16), params["bo"],
        params["ln1w"], params["ln1b"],
        params["w1"].T.astype(bf16), params["b1"],
        params["w2"].T.astype(bf16), params["b2"],
        params["ln2w"], params["ln2b"],
    ]

    def weight_spec(shape):                                  # grid-invariant blocks
        nd = len(shape)
        return pl.BlockSpec(shape, lambda b, _nd=nd: (0,) * _nd)

    grid_spec = pltpu.PrefetchScalarGridSpec(
        num_scalar_prefetch=0,
        grid=(num_blocks,),
        in_specs=[
            pl.BlockSpec((batch_block, S, D), lambda b: (b, 0, 0)),   # x (batch block)
            pl.BlockSpec((batch_block, 1, S), lambda b: (b, 0, 0)),   # key-padding mask
            pl.BlockSpec((S, D), lambda b: (0, 0)),                   # positional encoding
        ] + [weight_spec(w.shape) for w in weights],
        out_specs=pl.BlockSpec((batch_block, S, D), lambda b: (b, 0, 0)),
        scratch_shapes=[pltpu.VMEM((batch_block * S, D), jnp.float32)],  # per-head ctx gather
    )

    out = pl.pallas_call(
        functools.partial(transformer_emb_kernel, nhead=nhead),
        out_shape=jax.ShapeDtypeStruct((B, S, D), jnp.float32),
        grid_spec=grid_spec,
        compiler_params=pltpu.CompilerParams(
            dimension_semantics=("parallel",),               # megacore-shardable batch axis
            vmem_limit_bytes=32 * 1024 * 1024,
        ),
    )(x, msk, pe, *weights)

    return jnp.transpose(out, (1, 0, 2))                     # back to (S, B, D)


# -------------------------- params / reference ------------------------------
def make_pe(max_len, d):
    pos = jnp.arange(max_len, dtype=jnp.float32)[:, None]
    div = jnp.exp(jnp.arange(0, d, 2, dtype=jnp.float32) * (-math.log(10000.0) / d))
    pe = jnp.zeros((max_len, d), jnp.float32)
    pe = pe.at[:, 0::2].set(jnp.sin(pos * div))
    pe = pe.at[:, 1::2].set(jnp.cos(pos * div))
    return pe


def init_params(key, d, nhid, max_len=64):
    ks = jax.random.split(key, 12)
    w = lambda k, s, sc=0.08: (sc * jax.random.normal(k, s)).astype(jnp.float32)
    return {
        "pe": make_pe(max_len, d),
        "wq": w(ks[0], (d, d)), "bq": w(ks[1], (1, d), 0.02),
        "wk": w(ks[2], (d, d)), "bk": w(ks[3], (1, d), 0.02),
        "wv": w(ks[4], (d, d)), "bv": w(ks[5], (1, d), 0.02),
        "wo": w(ks[6], (d, d)), "bo": w(ks[7], (1, d), 0.02),
        "ln1w": jnp.ones((1, d), jnp.float32), "ln1b": jnp.zeros((1, d), jnp.float32),
        "w1": w(ks[8], (nhid, d)), "b1": w(ks[9], (1, nhid), 0.02),
        "w2": w(ks[10], (d, nhid)), "b2": w(ks[11], (1, d), 0.02),
        "ln2w": jnp.ones((1, d), jnp.float32), "ln2b": jnp.zeros((1, d), jnp.float32),
    }


def _ref_layer(x, pad, p, nhead):
    d = x.shape[-1]
    hd = d // nhead
    q = x @ p["wq"].T + p["bq"][0]
    k = x @ p["wk"].T + p["bk"][0]
    v = x @ p["wv"].T + p["bv"][0]
    qh = q.reshape(-1, nhead, hd).transpose(1, 0, 2)
    kh = k.reshape(-1, nhead, hd).transpose(1, 0, 2)
    vh = v.reshape(-1, nhead, hd).transpose(1, 0, 2)
    s = jnp.einsum("hqd,hkd->hqk", qh, kh) / math.sqrt(hd)
    s = jnp.where(pad[None, None, :] > 0.5, -jnp.inf, s)
    att = jax.nn.softmax(s, axis=-1)
    ctx = jnp.einsum("hqk,hkd->hqd", att, vh).transpose(1, 0, 2).reshape(-1, d)
    attn_out = ctx @ p["wo"].T + p["bo"][0]

    def ln(y, w_, b_):
        mu = y.mean(-1, keepdims=True)
        var = ((y - mu) ** 2).mean(-1, keepdims=True)
        return (y - mu) / jnp.sqrt(var + LN_EPS) * w_[0] + b_[0]

    y = ln(x + attn_out, p["ln1w"], p["ln1b"])
    ff = jnp.maximum(y @ p["w1"].T + p["b1"][0], 0.0) @ p["w2"].T + p["b2"][0]
    return ln(y + ff, p["ln2w"], p["ln2b"])


def ref_forward(src, seq_msk, params, nhead):
    S, _, D = src.shape
    x = src * math.sqrt(D) + params["pe"][:S][:, None, :]
    xb = jnp.transpose(x, (1, 0, 2))
    out = jax.vmap(lambda xi, mi: _ref_layer(xi, mi, params, nhead))(
        xb, seq_msk.astype(jnp.float32))
    return jnp.transpose(out, (1, 0, 2))


# ------------------------------- main ----------------------------------------
if __name__ == "__main__":
    # TODO(synk): dropout layers are treated as identity (eval-mode forward).
    ninp, nhead, nhid = 32, 4, 64
    S, B = 8, 2

    key = jax.random.PRNGKey(0)
    k_param, k_src = jax.random.split(key)
    params = init_params(k_param, ninp, nhid)

    src = jax.random.normal(k_src, (S, B, ninp), dtype=jnp.float32)     # (seq, batch, ninp)
    seq_msk = jnp.array([[False] * S,
                         [False] * (S - 2) + [True] * 2])               # (batch, seq), True = pad

    out = transformer_emb_forward(src, seq_msk, params, nhead)
    out = jax.block_until_ready(out)

    # f32 ground-truth reference (kernel feeds the MXU bf16 operands w/ f32 accumulation)
    with jax.default_matmul_precision("highest"):
        ref = ref_forward(src, seq_msk, params, nhead)
    ref = jax.block_until_ready(ref)

    assert out.shape == (S, B, ninp)
    assert bool(jnp.all(jnp.isfinite(out)))
    # tolerance sized for bf16 matmul operands vs. an f32 reference
    assert bool(jnp.allclose(out, ref, atol=5e-2, rtol=5e-2)), "mismatch vs JAX reference"

    print("KERNEL_OK")
</pallas_src>

<mosaic_0001>
module attributes {stable_mosaic.version = 11 : i64} {
  func.func @transformer_emb_kernel(%arg0: i32, %arg1: memref<1x8x32xf32, #tpu.memory_space<vmem>>, %arg2: memref<1x1x8xf32, #tpu.memory_space<vmem>>, %arg3: memref<8x32xf32, #tpu.memory_space<vmem>>, %arg4: memref<32x96xbf16, #tpu.memory_space<vmem>>, %arg5: memref<1x96xf32, #tpu.memory_space<vmem>>, %arg6: memref<32x32xbf16, #tpu.memory_space<vmem>>, %arg7: memref<1x32xf32, #tpu.memory_space<vmem>>, %arg8: memref<1x32xf32, #tpu.memory_space<vmem>>, %arg9: memref<1x32xf32, #tpu.memory_space<vmem>>, %arg10: memref<32x64xbf16, #tpu.memory_space<vmem>>, %arg11: memref<1x64xf32, #tpu.memory_space<vmem>>, %arg12: memref<64x32xbf16, #tpu.memory_space<vmem>>, %arg13: memref<1x32xf32, #tpu.memory_space<vmem>>, %arg14: memref<1x32xf32, #tpu.memory_space<vmem>>, %arg15: memref<1x32xf32, #tpu.memory_space<vmem>>, %arg16: memref<1x8x32xf32, #tpu.memory_space<vmem>>, %arg17: memref<8x32xf32, #tpu.memory_space<vmem>>) attributes {dimension_semantics = [#tpu.dimension_semantics<parallel>], iteration_bounds = array<i64: 2>, scalar_prefetch = 0 : i64, scratch_operands = 1 : i64, tpu.core_type = #tpu.core_type<tc>, window_params = [{transform_indices = @transform_0, window_bounds = array<i64: 1, 8, 32>}, {transform_indices = @transform_1, window_bounds = array<i64: 1, 1, 8>}, {pipeline_mode = #tpu.pipeline_mode<synchronous>, transform_indices = @transform_2, window_bounds = array<i64: 8, 32>}, {pipeline_mode = #tpu.pipeline_mode<synchronous>, transform_indices = @transform_3, window_bounds = array<i64: 32, 96>}, {pipeline_mode = #tpu.pipeline_mode<synchronous>, transform_indices = @transform_4, window_bounds = array<i64: 1, 96>}, {pipeline_mode = #tpu.pipeline_mode<synchronous>, transform_indices = @transform_5, window_bounds = array<i64: 32, 32>}, {pipeline_mode = #tpu.pipeline_mode<synchronous>, transform_indices = @transform_6, window_bounds = array<i64: 1, 32>}, {pipeline_mode = #tpu.pipeline_mode<synchronous>, transform_indices = @transform_7, window_bounds = array<i64: 1, 32>}, {pipeline_mode = #tpu.pipeline_mode<synchronous>, transform_indices = @transform_8, window_bounds = array<i64: 1, 32>}, {pipeline_mode = #tpu.pipeline_mode<synchronous>, transform_indices = @transform_9, window_bounds = array<i64: 32, 64>}, {pipeline_mode = #tpu.pipeline_mode<synchronous>, transform_indices = @transform_10, window_bounds = array<i64: 1, 64>}, {pipeline_mode = #tpu.pipeline_mode<synchronous>, transform_indices = @transform_11, window_bounds = array<i64: 64, 32>}, {pipeline_mode = #tpu.pipeline_mode<synchronous>, transform_indices = @transform_12, window_bounds = array<i64: 1, 32>}, {pipeline_mode = #tpu.pipeline_mode<synchronous>, transform_indices = @transform_13, window_bounds = array<i64: 1, 32>}, {pipeline_mode = #tpu.pipeline_mode<synchronous>, transform_indices = @transform_14, window_bounds = array<i64: 1, 32>}, {transform_indices = @transform_15, window_bounds = array<i64: 1, 8, 32>}]} {
    %c0 = arith.constant 0 : index
    %c0_0 = arith.constant 0 : index
    %c0_1 = arith.constant 0 : index
    %0 = vector.load %arg1[%c0, %c0_0, %c0_1] : memref<1x8x32xf32, #tpu.memory_space<vmem>>, vector<1x8x32xf32>
    %cst = arith.constant 5.65685415 : f32
    %1 = vector.broadcast %cst : f32 to vector<1x8x32xf32>
    %2 = arith.mulf %0, %1 : vector<1x8x32xf32>
    %c0_2 = arith.constant 0 : index
    %c0_3 = arith.constant 0 : index
    %3 = vector.load %arg3[%c0_2, %c0_3] : memref<8x32xf32, #tpu.memory_space<vmem>>, vector<8x32xf32>
    %4 = vector.shape_cast %3 : vector<8x32xf32> to vector<1x8x32xf32>
    %5 = arith.addf %2, %4 : vector<1x8x32xf32>
    %6 = vector.shape_cast %5 : vector<1x8x32xf32> to vector<8x32xf32>
    %7 = arith.truncf %6 : vector<8x32xf32> to vector<8x32xbf16>
    %c0_4 = arith.constant 0 : index
    %c0_5 = arith.constant 0 : index
    %8 = vector.load %arg4[%c0_4, %c0_5] : memref<32x96xbf16, #tpu.memory_space<vmem>>, vector<32x96xbf16>
    %cst_6 = arith.constant dense<0.000000e+00> : vector<8x96xf32>
    %9 = tpu.matmul %7, %8, %cst_6 {dimension_numbers = #tpu.dot_dimension_numbers<[1], [0], [0], [1], [0, 0, 1, 1], [], []>} : vector<8x32xbf16>, vector<32x96xbf16>, vector<8x96xf32> -> vector<8x96xf32>
    %c0_7 = arith.constant 0 : index
    %c0_8 = arith.constant 0 : index
    %10 = vector.load %arg5[%c0_7, %c0_8] : memref<1x96xf32, #tpu.memory_space<vmem>>, vector<1x96xf32>
    %11 = vector.broadcast %10 : vector<1x96xf32> to vector<8x96xf32>
    %12 = arith.addf %9, %11 : vector<8x96xf32>
    %c0_9 = arith.constant 0 : index
    %c0_10 = arith.constant 0 : index
    %c0_11 = arith.constant 0 : index
    %13 = vector.load %arg2[%c0_9, %c0_10, %c0_11] : memref<1x1x8xf32, #tpu.memory_space<vmem>>, vector<1x1x8xf32>
    %cst_12 = arith.constant 5.000000e-01 : f32
    %14 = vector.broadcast %cst_12 : f32 to vector<1x1x8xf32>
    %15 = arith.cmpf ogt, %13, %14 : vector<1x1x8xf32>
    %cst_13 = arith.constant -1.000000e+30 : f32
    %cst_14 = arith.constant 0.000000e+00 : f32
    %16 = vector.broadcast %cst_13 : f32 to vector<1x1x8xf32>
    %17 = vector.broadcast %cst_14 : f32 to vector<1x1x8xf32>
    %18 = arith.select %15, %16, %17 : vector<1x1x8xi1>, vector<1x1x8xf32>
    %19 = vector.extract_strided_slice %12 {offsets = [0, 0], sizes = [8, 8], strides = [1, 1]} : vector<8x96xf32> to vector<8x8xf32>
    %20 = vector.shape_cast %19 : vector<8x8xf32> to vector<1x8x8xf32>
    %21 = arith.truncf %20 : vector<1x8x8xf32> to vector<1x8x8xbf16>
    %22 = vector.extract_strided_slice %12 {offsets = [0, 32], sizes = [8, 8], strides = [1, 1]} : vector<8x96xf32> to vector<8x8xf32>
    %23 = vector.shape_cast %22 : vector<8x8xf32> to vector<1x8x8xf32>
    %24 = arith.truncf %23 : vector<1x8x8xf32> to vector<1x8x8xbf16>
    %25 = vector.extract_strided_slice %12 {offsets = [0, 64], sizes = [8, 8], strides = [1, 1]} : vector<8x96xf32> to vector<8x8xf32>
    %26 = vector.shape_cast %25 : vector<8x8xf32> to vector<1x8x8xf32>
    %27 = arith.truncf %26 : vector<1x8x8xf32> to vector<1x8x8xbf16>
    "tpu.trace_start"() <{level = 10 : i32, message = "bqd,bkd->bqk"}> : () -> ()
    %cst_15 = arith.constant dense<0.000000e+00> : vector<1x8x8xf32>
    %28 = tpu.matmul %21, %24, %cst_15 {dimension_numbers = #tpu.dot_dimension_numbers<[2], [2], [1], [1], [0, 0, 0, 1, 1, 1], [0], [0]>} : vector<1x8x8xbf16>, vector<1x8x8xbf16>, vector<1x8x8xf32> -> vector<1x8x8xf32>
    "tpu.trace_stop"() : () -> ()
    %29 = vector.broadcast %18 : vector<1x1x8xf32> to vector<1x8x8xf32>
    %30 = arith.addf %28, %29 : vector<1x8x8xf32>
    %cst_16 = arith.constant dense<0xFF800000> : vector<1x8xf32>
    %31 = vector.multi_reduction <maximumf>, %30, %cst_16 [2] : vector<1x8x8xf32> to vector<1x8xf32>
    %32 = vector.shape_cast %31 : vector<1x8xf32> to vector<1x8x1xf32>
    %33 = vector.broadcast %32 : vector<1x8x1xf32> to vector<1x8x8xf32>
    %34 = arith.subf %30, %33 : vector<1x8x8xf32>
    %35 = math.exp %34 : vector<1x8x8xf32>
    %cst_17 = arith.constant dense<0.000000e+00> : vector<1x8xf32>
    %36 = vector.multi_reduction <add>, %35, %cst_17 [2] : vector<1x8x8xf32> to vector<1x8xf32>
    %37 = vector.shape_cast %36 : vector<1x8xf32> to vector<1x8x1xf32>
    %38 = arith.truncf %35 : vector<1x8x8xf32> to vector<1x8x8xbf16>
    "tpu.trace_start"() <{level = 10 : i32, message = "bqk,bkd->bqd"}> : () -> ()
    %cst_18 = arith.constant dense<0.000000e+00> : vector<1x8x8xf32>
    %39 = tpu.matmul %38, %27, %cst_18 {dimension_numbers = #tpu.dot_dimension_numbers<[2], [1], [1], [2], [0, 0, 0, 1, 1, 2], [0], [0]>} : vector<1x8x8xbf16>, vector<1x8x8xbf16>, vector<1x8x8xf32> -> vector<1x8x8xf32>
    "tpu.trace_stop"() : () -> ()
    %40 = vector.broadcast %37 : vector<1x8x1xf32> to vector<1x8x8xf32>
    %41 = arith.divf %39, %40 : vector<1x8x8xf32>
    %42 = vector.shape_cast %41 : vector<1x8x8xf32> to vector<8x8xf32>
    %c0_19 = arith.constant 0 : index
    %c0_20 = arith.constant 0 : index
    %43 = vector.load %arg17[%c0_19, %c0_20] : memref<8x32xf32, #tpu.memory_space<vmem>>, vector<8x8xf32>
    tpu.vector_store %arg17[%c0_19, %c0_20], %42 {strides = array<i32>} : memref<8x32xf32, #tpu.memory_space<vmem>>, vector<8x8xf32>,
    %44 = vector.extract_strided_slice %12 {offsets = [0, 8], sizes = [8, 8], strides = [1, 1]} : vector<8x96xf32> to vector<8x8xf32>
    %45 = vector.shape_cast %44 : vector<8x8xf32> to vector<1x8x8xf32>
    %46 = arith.truncf %45 : vector<1x8x8xf32> to vector<1x8x8xbf16>
    %47 = vector.extract_strided_slice %12 {offsets = [0, 40], sizes = [8, 8], strides = [1, 1]} : vector<8x96xf32> to vector<8x8xf32>
    %48 = vector.shape_cast %47 : vector<8x8xf32> to vector<1x8x8xf32>
    %49 = arith.truncf %48 : vector<1x8x8xf32> to vector<1x8x8xbf16>
    %50 = vector.extract_strided_slice %12 {offsets = [0, 72], sizes = [8, 8], strides = [1, 1]} : vector<8x96xf32> to vector<8x8xf32>
    %51 = vector.shape_cast %50 : vector<8x8xf32> to vector<1x8x8xf32>
    %52 = arith.truncf %51 : vector<1x8x8xf32> to vector<1x8x8xbf16>
    "tpu.trace_start"() <{level = 10 : i32, message = "bqd,bkd->bqk"}> : () -> ()
    %cst_21 = arith.constant dense<0.000000e+00> : vector<1x8x8xf32>
    %53 = tpu.matmul %46, %49, %cst_21 {dimension_numbers = #tpu.dot_dimension_numbers<[2], [2], [1], [1], [0, 0, 0, 1, 1, 1], [0], [0]>} : vector<1x8x8xbf16>, vector<1x8x8xbf16>, vector<1x8x8xf32> -> vector<1x8x8xf32>
    "tpu.trace_stop"() : () -> ()
    %54 = vector.broadcast %18 : vector<1x1x8xf32> to vector<1x8x8xf32>
    %55 = arith.addf %53, %54 : vector<1x8x8xf32>
    %cst_22 = arith.constant dense<0xFF800000> : vector<1x8xf32>
    %56 = vector.multi_reduction <maximumf>, %55, %cst_22 [2] : vector<1x8x8xf32> to vector<1x8xf32>
    %57 = vector.shape_cast %56 : vector<1x8xf32> to vector<1x8x1xf32>
    %58 = vector.broadcast %57 : vector<1x8x1xf32> to vector<1x8x8xf32>
    %59 = arith.subf %55, %58 : vector<1x8x8xf32>
    %60 = math.exp %59 : vector<1x8x8xf32>
    %cst_23 = arith.constant dense<0.000000e+00> : vector<1x8xf32>
    %61 = vector.multi_reduction <add>, %60, %cst_23 [2] : vector<1x8x8xf32> to vector<1x8xf32>
    %62 = vector.shape_cast %61 : vector<1x8xf32> to vector<1x8x1xf32>
    %63 = arith.truncf %60 : vector<1x8x8xf32> to vector<1x8x8xbf16>
    "tpu.trace_start"() <{level = 10 : i32, message = "bqk,bkd->bqd"}> : () -> ()
    %cst_24 = arith.constant dense<0.000000e+00> : vector<1x8x8xf32>
    %64 = tpu.matmul %63, %52, %cst_24 {dimension_numbers = #tpu.dot_dimension_numbers<[2], [1], [1], [2], [0, 0, 0, 1, 1, 2], [0], [0]>} : vector<1x8x8xbf16>, vector<1x8x8xbf16>, vector<1x8x8xf32> -> vector<1x8x8xf32>
    "tpu.trace_stop"() : () -> ()
    %65 = vector.broadcast %62 : vector<1x8x1xf32> to vector<1x8x8xf32>
    %66 = arith.divf %64, %65 : vector<1x8x8xf32>
    %67 = vector.shape_cast %66 : vector<1x8x8xf32> to vector<8x8xf32>
    %c0_25 = arith.constant 0 : index
    %c8 = arith.constant 8 : index
    %68 = vector.load %arg17[%c0_25, %c8] : memref<8x32xf32, #tpu.memory_space<vmem>>, vector<8x8xf32>
    tpu.vector_store %arg17[%c0_25, %c8], %67 {strides = array<i32>} : memref<8x32xf32, #tpu.memory_space<vmem>>, vector<8x8xf32>,
    %69 = vector.extract_strided_slice %12 {offsets = [0, 16], sizes = [8, 8], strides = [1, 1]} : vector<8x96xf32> to vector<8x8xf32>
    %70 = vector.shape_cast %69 : vector<8x8xf32> to vector<1x8x8xf32>
    %71 = arith.truncf %70 : vector<1x8x8xf32> to vector<1x8x8xbf16>
    %72 = vector.extract_strided_slice %12 {offsets = [0, 48], sizes = [8, 8], strides = [1, 1]} : vector<8x96xf32> to vector<8x8xf32>
    %73 = vector.shape_cast %72 : vector<8x8xf32> to vector<1x8x8xf32>
    %74 = arith.truncf %73 : vector<1x8x8xf32> to vector<1x8x8xbf16>
    %75 = vector.extract_strided_slice %12 {offsets = [0, 80], sizes = [8, 8], strides = [1, 1]} : vector<8x96xf32> to vector<8x8xf32>
    %76 = vector.shape_cast %75 : vector<8x8xf32> to vector<1x8x8xf32>
    %77 = arith.truncf %76 : vector<1x8x8xf32> to vector<1x8x8xbf16>
    "tpu.trace_start"() <{level = 10 : i32, message = "bqd,bkd->bqk"}> : () -> ()
    %cst_26 = arith.constant dense<0.000000e+00> : vector<1x8x8xf32>
    %78 = tpu.matmul %71, %74, %cst_26 {dimension_numbers = #tpu.dot_dimension_numbers<[2], [2], [1], [1], [0, 0, 0, 1, 1, 1], [0], [0]>} : vector<1x8x8xbf16>, vector<1x8x8xbf16>, vector<1x8x8xf32> -> vector<1x8x8xf32>
    "tpu.trace_stop"() : () -> ()
    %79 = vector.broadcast %18 : vector<1x1x8xf32> to vector<1x8x8xf32>
    %80 = arith.addf %78, %79 : vector<1x8x8xf32>
    %cst_27 = arith.constant dense<0xFF800000> : vector<1x8xf32>
    %81 = vector.multi_reduction <maximumf>, %80, %cst_27 [2] : vector<1x8x8xf32> to vector<1x8xf32>
    %82 = vector.shape_cast %81 : vector<1x8xf32> to vector<1x8x1xf32>
    %83 = vector.broadcast %82 : vector<1x8x1xf32> to vector<1x8x8xf32>
    %84 = arith.subf %80, %83 : vector<1x8x8xf32>
    %85 = math.exp %84 : vector<1x8x8xf32>
    %cst_28 = arith.constant dense<0.000000e+00> : vector<1x8xf32>
    %86 = vector.multi_reduction <add>, %85, %cst_28 [2] : vector<1x8x8xf32> to vector<1x8xf32>
    %87 = vector.shape_cast %86 : vector<1x8xf32> to vector<1x8x1xf32>
    %88 = arith.truncf %85 : vector<1x8x8xf32> to vector<1x8x8xbf16>
    "tpu.trace_start"() <{level = 10 : i32, message = "bqk,bkd->bqd"}> : () -> ()
    %cst_29 = arith.constant dense<0.000000e+00> : vector<1x8x8xf32>
    %89 = tpu.matmul %88, %77, %cst_29 {dimension_numbers = #tpu.dot_dimension_numbers<[2], [1], [1], [2], [0, 0, 0, 1, 1, 2], [0], [0]>} : vector<1x8x8xbf16>, vector<1x8x8xbf16>, vector<1x8x8xf32> -> vector<1x8x8xf32>
    "tpu.trace_stop"() : () -> ()
    %90 = vector.broadcast %87 : vector<1x8x1xf32> to vector<1x8x8xf32>
    %91 = arith.divf %89, %90 : vector<1x8x8xf32>
    %92 = vector.shape_cast %91 : vector<1x8x8xf32> to vector<8x8xf32>
    %c0_30 = arith.constant 0 : index
    %c16 = arith.constant 16 : index
    %93 = vector.load %arg17[%c0_30, %c16] : memref<8x32xf32, #tpu.memory_space<vmem>>, vector<8x8xf32>
    tpu.vector_store %arg17[%c0_30, %c16], %92 {strides = array<i32>} : memref<8x32xf32, #tpu.memory_space<vmem>>, vector<8x8xf32>,
    %94 = vector.extract_strided_slice %12 {offsets = [0, 24], sizes = [8, 8], strides = [1, 1]} : vector<8x96xf32> to vector<8x8xf32>
    %95 = vector.shape_cast %94 : vector<8x8xf32> to vector<1x8x8xf32>
    %96 = arith.truncf %95 : vector<1x8x8xf32> to vector<1x8x8xbf16>
    %97 = vector.extract_strided_slice %12 {offsets = [0, 56], sizes = [8, 8], strides = [1, 1]} : vector<8x96xf32> to vector<8x8xf32>
    %98 = vector.shape_cast %97 : vector<8x8xf32> to vector<1x8x8xf32>
    %99 = arith.truncf %98 : vector<1x8x8xf32> to vector<1x8x8xbf16>
    %100 = vector.extract_strided_slice %12 {offsets = [0, 88], sizes = [8, 8], strides = [1, 1]} : vector<8x96xf32> to vector<8x8xf32>
    %101 = vector.shape_cast %100 : vector<8x8xf32> to vector<1x8x8xf32>
    %102 = arith.truncf %101 : vector<1x8x8xf32> to vector<1x8x8xbf16>
    "tpu.trace_start"() <{level = 10 : i32, message = "bqd,bkd->bqk"}> : () -> ()
    %cst_31 = arith.constant dense<0.000000e+00> : vector<1x8x8xf32>
    %103 = tpu.matmul %96, %99, %cst_31 {dimension_numbers = #tpu.dot_dimension_numbers<[2], [2], [1], [1], [0, 0, 0, 1, 1, 1], [0], [0]>} : vector<1x8x8xbf16>, vector<1x8x8xbf16>, vector<1x8x8xf32> -> vector<1x8x8xf32>
    "tpu.trace_stop"() : () -> ()
    %104 = vector.broadcast %18 : vector<1x1x8xf32> to vector<1x8x8xf32>
    %105 = arith.addf %103, %104 : vector<1x8x8xf32>
    %cst_32 = arith.constant dense<0xFF800000> : vector<1x8xf32>
    %106 = vector.multi_reduction <maximumf>, %105, %cst_32 [2] : vector<1x8x8xf32> to vector<1x8xf32>
    %107 = vector.shape_cast %106 : vector<1x8xf32> to vector<1x8x1xf32>
    %108 = vector.broadcast %107 : vector<1x8x1xf32> to vector<1x8x8xf32>
    %109 = arith.subf %105, %108 : vector<1x8x8xf32>
    %110 = math.exp %109 : vector<1x8x8xf32>
    %cst_33 = arith.constant dense<0.000000e+00> : vector<1x8xf32>
    %111 = vector.multi_reduction <add>, %110, %cst_33 [2] : vector<1x8x8xf32> to vector<1x8xf32>
    %112 = vector.shape_cast %111 : vector<1x8xf32> to vector<1x8x1xf32>
    %113 = arith.truncf %110 : vector<1x8x8xf32> to vector<1x8x8xbf16>
    "tpu.trace_start"() <{level = 10 : i32, message = "bqk,bkd->bqd"}> : () -> ()
    %cst_34 = arith.constant dense<0.000000e+00> : vector<1x8x8xf32>
    %114 = tpu.matmul %113, %102, %cst_34 {dimension_numbers = #tpu.dot_dimension_numbers<[2], [1], [1], [2], [0, 0, 0, 1, 1, 2], [0], [0]>} : vector<1x8x8xbf16>, vector<1x8x8xbf16>, vector<1x8x8xf32> -> vector<1x8x8xf32>
    "tpu.trace_stop"() : () -> ()
    %115 = vector.broadcast %112 : vector<1x8x1xf32> to vector<1x8x8xf32>
    %116 = arith.divf %114, %115 : vector<1x8x8xf32>
    %117 = vector.shape_cast %116 : vector<1x8x8xf32> to vector<8x8xf32>
    %c0_35 = arith.constant 0 : index
    %c24 = arith.constant 24 : index
    %118 = vector.load %arg17[%c0_35, %c24] : memref<8x32xf32, #tpu.memory_space<vmem>>, vector<8x8xf32>
    tpu.vector_store %arg17[%c0_35, %c24], %117 {strides = array<i32>} : memref<8x32xf32, #tpu.memory_space<vmem>>, vector<8x8xf32>,
    %c0_36 = arith.constant 0 : index
    %c0_37 = arith.constant 0 : index
    %119 = vector.load %arg17[%c0_36, %c0_37] : memref<8x32xf32, #tpu.memory_space<vmem>>, vector<8x32xf32>
    %120 = arith.truncf %119 : vector<8x32xf32> to vector<8x32xbf16>
    %c0_38 = arith.constant 0 : index
    %c0_39 = arith.constant 0 : index
    %121 = vector.load %arg6[%c0_38, %c0_39] : memref<32x32xbf16, #tpu.memory_space<vmem>>, vector<32x32xbf16>
    %cst_40 = arith.constant dense<0.000000e+00> : vector<8x32xf32>
    %122 = tpu.matmul %120, %121, %cst_40 {dimension_numbers = #tpu.dot_dimension_numbers<[1], [0], [0], [1], [0, 0, 1, 1], [], []>} : vector<8x32xbf16>, vector<32x32xbf16>, vector<8x32xf32> -> vector<8x32xf32>
    %c0_41 = arith.constant 0 : index
    %c0_42 = arith.constant 0 : index
    %123 = vector.load %arg7[%c0_41, %c0_42] : memref<1x32xf32, #tpu.memory_space<vmem>>, vector<1x32xf32>
    %124 = vector.broadcast %123 : vector<1x32xf32> to vector<8x32xf32>
    %125 = arith.addf %122, %124 : vector<8x32xf32>
    %126 = arith.addf %6, %125 : vector<8x32xf32>
    %c0_43 = arith.constant 0 : index
    %c0_44 = arith.constant 0 : index
    %127 = vector.load %arg8[%c0_43, %c0_44] : memref<1x32xf32, #tpu.memory_space<vmem>>, vector<1x32xf32>
    %c0_45 = arith.constant 0 : index
    %c0_46 = arith.constant 0 : index
    %128 = vector.load %arg9[%c0_45, %c0_46] : memref<1x32xf32, #tpu.memory_space<vmem>>, vector<1x32xf32>
    %cst_47 = arith.constant dense<0.000000e+00> : vector<8xf32>
    %129 = vector.multi_reduction <add>, %126, %cst_47 [1] : vector<8x32xf32> to vector<8xf32>
    %130 = vector.shape_cast %129 : vector<8xf32> to vector<8x1xf32>
    %cst_48 = arith.constant 3.200000e+01 : f32
    %131 = vector.broadcast %cst_48 : f32 to vector<8x1xf32>
    %132 = arith.divf %130, %131 : vector<8x1xf32>
    %133 = vector.broadcast %132 : vector<8x1xf32> to vector<8x32xf32>
    %134 = arith.subf %126, %133 : vector<8x32xf32>
    %135 = arith.mulf %134, %134 : vector<8x32xf32>
    %cst_49 = arith.constant dense<0.000000e+00> : vector<8xf32>
    %136 = vector.multi_reduction <add>, %135, %cst_49 [1] : vector<8x32xf32> to vector<8xf32>
    %137 = vector.shape_cast %136 : vector<8xf32> to vector<8x1xf32>
    %cst_50 = arith.constant 3.200000e+01 : f32
    %138 = vector.broadcast %cst_50 : f32 to vector<8x1xf32>
    %139 = arith.divf %137, %138 : vector<8x1xf32>
    %140 = vector.broadcast %132 : vector<8x1xf32> to vector<8x32xf32>
    %141 = arith.subf %126, %140 : vector<8x32xf32>
    %cst_51 = arith.constant 9.99999974E-6 : f32
    %142 = vector.broadcast %cst_51 : f32 to vector<8x1xf32>
    %143 = arith.addf %139, %142 : vector<8x1xf32>
    %144 = math.rsqrt %143 : vector<8x1xf32>
    %145 = vector.broadcast %144 : vector<8x1xf32> to vector<8x32xf32>
    %146 = arith.mulf %141, %145 : vector<8x32xf32>
    %147 = vector.broadcast %127 : vector<1x32xf32> to vector<8x32xf32>
    %148 = arith.mulf %146, %147 : vector<8x32xf32>
    %149 = vector.broadcast %128 : vector<1x32xf32> to vector<8x32xf32>
    %150 = arith.addf %148, %149 : vector<8x32xf32>
    %151 = arith.truncf %150 : vector<8x32xf32> to vector<8x32xbf16>
    %c0_52 = arith.constant 0 : index
    %c0_53 = arith.constant 0 : index
    %152 = vector.load %arg10[%c0_52, %c0_53] : memref<32x64xbf16, #tpu.memory_space<vmem>>, vector<32x64xbf16>
    %cst_54 = arith.constant dense<0.000000e+00> : vector<8x64xf32>
    %153 = tpu.matmul %151, %152, %cst_54 {dimension_numbers = #tpu.dot_dimension_numbers<[1], [0], [0], [1], [0, 0, 1, 1], [], []>} : vector<8x32xbf16>, vector<32x64xbf16>, vector<8x64xf32> -> vector<8x64xf32>
    %c0_55 = arith.constant 0 : index
    %c0_56 = arith.constant 0 : index
    %154 = vector.load %arg11[%c0_55, %c0_56] : memref<1x64xf32, #tpu.memory_space<vmem>>, vector<1x64xf32>
    %155 = vector.broadcast %154 : vector<1x64xf32> to vector<8x64xf32>
    %156 = arith.addf %153, %155 : vector<8x64xf32>
    %cst_57 = arith.constant 0.000000e+00 : f32
    %157 = vector.broadcast %cst_57 : f32 to vector<8x64xf32>
    %158 = arith.maximumf %156, %157 : vector<8x64xf32>
    %159 = arith.truncf %158 : vector<8x64xf32> to vector<8x64xbf16>
    %c0_58 = arith.constant 0 : index
    %c0_59 = arith.constant 0 : index
    %160 = vector.load %arg12[%c0_58, %c0_59] : memref<64x32xbf16, #tpu.memory_space<vmem>>, vector<64x32xbf16>
    %cst_60 = arith.constant dense<0.000000e+00> : vector<8x32xf32>
    %161 = tpu.matmul %159, %160, %cst_60 {dimension_numbers = #tpu.dot_dimension_numbers<[1], [0], [0], [1], [0, 0, 1, 1], [], []>} : vector<8x64xbf16>, vector<64x32xbf16>, vector<8x32xf32> -> vector<8x32xf32>
    %c0_61 = arith.constant 0 : index
    %c0_62 = arith.constant 0 : index
    %162 = vector.load %arg13[%c0_61, %c0_62] : memref<1x32xf32, #tpu.memory_space<vmem>>, vector<1x32xf32>
    %163 = vector.broadcast %162 : vector<1x32xf32> to vector<8x32xf32>
    %164 = arith.addf %161, %163 : vector<8x32xf32>
    %165 = arith.addf %150, %164 : vector<8x32xf32>
    %c0_63 = arith.constant 0 : index
    %c0_64 = arith.constant 0 : index
    %166 = vector.load %arg14[%c0_63, %c0_64] : memref<1x32xf32, #tpu.memory_space<vmem>>, vector<1x32xf32>
    %c0_65 = arith.constant 0 : index
    %c0_66 = arith.constant 0 : index
    %167 = vector.load %arg15[%c0_65, %c0_66] : memref<1x32xf32, #tpu.memory_space<vmem>>, vector<1x32xf32>
    %cst_67 = arith.constant dense<0.000000e+00> : vector<8xf32>
    %168 = vector.multi_reduction <add>, %165, %cst_67 [1] : vector<8x32xf32> to vector<8xf32>
    %169 = vector.shape_cast %168 : vector<8xf32> to vector<8x1xf32>
    %cst_68 = arith.constant 3.200000e+01 : f32
    %170 = vector.broadcast %cst_68 : f32 to vector<8x1xf32>
    %171 = arith.divf %169, %170 : vector<8x1xf32>
    %172 = vector.broadcast %171 : vector<8x1xf32> to vector<8x32xf32>
    %173 = arith.subf %165, %172 : vector<8x32xf32>
    %174 = arith.mulf %173, %173 : vector<8x32xf32>
    %cst_69 = arith.constant dense<0.000000e+00> : vector<8xf32>
    %175 = vector.multi_reduction <add>, %174, %cst_69 [1] : vector<8x32xf32> to vector<8xf32>
    %176 = vector.shape_cast %175 : vector<8xf32> to vector<8x1xf32>
    %cst_70 = arith.constant 3.200000e+01 : f32
    %177 = vector.broadcast %cst_70 : f32 to vector<8x1xf32>
    %178 = arith.divf %176, %177 : vector<8x1xf32>
    %179 = vector.broadcast %171 : vector<8x1xf32> to vector<8x32xf32>
    %180 = arith.subf %165, %179 : vector<8x32xf32>
    %cst_71 = arith.constant 9.99999974E-6 : f32
    %181 = vector.broadcast %cst_71 : f32 to vector<8x1xf32>
    %182 = arith.addf %178, %181 : vector<8x1xf32>
    %183 = math.rsqrt %182 : vector<8x1xf32>
    %184 = vector.broadcast %183 : vector<8x1xf32> to vector<8x32xf32>
    %185 = arith.mulf %180, %184 : vector<8x32xf32>
    %186 = vector.broadcast %166 : vector<1x32xf32> to vector<8x32xf32>
    %187 = arith.mulf %185, %186 : vector<8x32xf32>
    %188 = vector.broadcast %167 : vector<1x32xf32> to vector<8x32xf32>
    %189 = arith.addf %187, %188 : vector<8x32xf32>
    %190 = vector.shape_cast %189 : vector<8x32xf32> to vector<1x8x32xf32>
    %c0_72 = arith.constant 0 : index
    %c0_73 = arith.constant 0 : index
    %c0_74 = arith.constant 0 : index
    %191 = vector.load %arg16[%c0_72, %c0_73, %c0_74] : memref<1x8x32xf32, #tpu.memory_space<vmem>>, vector<1x8x32xf32>
    tpu.vector_store %arg16[%c0_72, %c0_73, %c0_74], %190 {strides = array<i32>} : memref<1x8x32xf32, #tpu.memory_space<vmem>>, vector<1x8x32xf32>,
    return
  }
  func.func @transform_0(%arg0: i32) -> (i32, i32, i32) {
    %c0_i32 = arith.constant 0 : i32
    %c0_i32_0 = arith.constant 0 : i32
    %c0_i32_1 = arith.constant 0 : i32
    return %arg0, %c0_i32, %c0_i32_0 : i32, i32, i32
  }
  func.func @transform_1(%arg0: i32) -> (i32, i32, i32) {
    %c0_i32 = arith.constant 0 : i32
    %c0_i32_0 = arith.constant 0 : i32
    %c0_i32_1 = arith.constant 0 : i32
    return %arg0, %c0_i32, %c0_i32_0 : i32, i32, i32
  }
  func.func @transform_2(%arg0: i32) -> (i32, i32) {
    %c0_i32 = arith.constant 0 : i32
    %c0_i32_0 = arith.constant 0 : i32
    %c0_i32_1 = arith.constant 0 : i32
    return %c0_i32, %c0_i32_0 : i32, i32
  }
  func.func @transform_3(%arg0: i32) -> (i32, i32) {
    %c0_i32 = arith.constant 0 : i32
    %c0_i32_0 = arith.constant 0 : i32
    %c0_i32_1 = arith.constant 0 : i32
    return %c0_i32, %c0_i32_0 : i32, i32
  }
  func.func @transform_4(%arg0: i32) -> (i32, i32) {
    %c0_i32 = arith.constant 0 : i32
    %c0_i32_0 = arith.constant 0 : i32
    %c0_i32_1 = arith.constant 0 : i32
    return %c0_i32, %c0_i32_0 : i32, i32
  }
  func.func @transform_5(%arg0: i32) -> (i32, i32) {
    %c0_i32 = arith.constant 0 : i32
    %c0_i32_0 = arith.constant 0 : i32
    %c0_i32_1 = arith.constant 0 : i32
    return %c0_i32, %c0_i32_0 : i32, i32
  }
  func.func @transform_6(%arg0: i32) -> (i32, i32) {
    %c0_i32 = arith.constant 0 : i32
    %c0_i32_0 = arith.constant 0 : i32
    %c0_i32_1 = arith.constant 0 : i32
    return %c0_i32, %c0_i32_0 : i32, i32
  }
  func.func @transform_7(%arg0: i32) -> (i32, i32) {
    %c0_i32 = arith.constant 0 : i32
    %c0_i32_0 = arith.constant 0 : i32
    %c0_i32_1 = arith.constant 0 : i32
    return %c0_i32, %c0_i32_0 : i32, i32
  }
  func.func @transform_8(%arg0: i32) -> (i32, i32) {
    %c0_i32 = arith.constant 0 : i32
    %c0_i32_0 = arith.constant 0 : i32
    %c0_i32_1 = arith.constant 0 : i32
    return %c0_i32, %c0_i32_0 : i32, i32
  }
  func.func @transform_9(%arg0: i32) -> (i32, i32) {
    %c0_i32 = arith.constant 0 : i32
    %c0_i32_0 = arith.constant 0 : i32
    %c0_i32_1 = arith.constant 0 : i32
    return %c0_i32, %c0_i32_0 : i32, i32
  }
  func.func @transform_10(%arg0: i32) -> (i32, i32) {
    %c0_i32 = arith.constant 0 : i32
    %c0_i32_0 = arith.constant 0 : i32
    %c0_i32_1 = arith.constant 0 : i32
    return %c0_i32, %c0_i32_0 : i32, i32
  }
  func.func @transform_11(%arg0: i32) -> (i32, i32) {
    %c0_i32 = arith.constant 0 : i32
    %c0_i32_0 = arith.constant 0 : i32
    %c0_i32_1 = arith.constant 0 : i32
    return %c0_i32, %c0_i32_0 : i32, i32
  }
  func.func @transform_12(%arg0: i32) -> (i32, i32) {
    %c0_i32 = arith.constant 0 : i32
    %c0_i32_0 = arith.constant 0 : i32
    %c0_i32_1 = arith.constant 0 : i32
    return %c0_i32, %c0_i32_0 : i32, i32
  }
  func.func @transform_13(%arg0: i32) -> (i32, i32) {
    %c0_i32 = arith.constant 0 : i32
    %c0_i32_0 = arith.constant 0 : i32
    %c0_i32_1 = arith.constant 0 : i32
    return %c0_i32, %c0_i32_0 : i32, i32
  }
  func.func @transform_14(%arg0: i32) -> (i32, i32) {
    %c0_i32 = arith.constant 0 : i32
    %c0_i32_0 = arith.constant 0 : i32
    %c0_i32_1 = arith.constant 0 : i32
    return %c0_i32, %c0_i32_0 : i32, i32
  }
  func.func @transform_15(%arg0: i32) -> (i32, i32, i32) {
    %c0_i32 = arith.constant 0 : i32
    %c0_i32_0 = arith.constant 0 : i32
    %c0_i32_1 = arith.constant 0 : i32
    return %arg0, %c0_i32, %c0_i32_0 : i32, i32, i32
  }
}

</mosaic_0001>

<llo_original>
// kernel: tpu_custom_call.1
$region0: #{tpu_custom_call.1}
  #allocation0 [shape = 'u32[]', space=smem, size = 0x4, offset = 0x4, fixed_abs, tag = 'smem constant byte address 0x4 - core index']
  #allocation1 [shape = 'u32[72,128]{1,0:T(1,128)}', space=vmem, size = 0x9000, scoped, tag = 'internal scratch']
  #allocation2 [shape = 'f32[8,32]{1,0:T(8,128)}', space=vmem, size = 0x1000, scoped, tag = 'scratch operand']
  %s0 = inlined_call_operand.vmem [shape: f32[2,8,32], index: 0, kind: input, shape index: {}]
  %s1 = inlined_call_operand.hbm [shape: f32[2,1,8], index: 1, kind: input, shape index: {}]
  %s2 = inlined_call_operand.hbm [shape: f32[8,32], index: 2, kind: input, shape index: {}]
  %s3 = inlined_call_operand.vmem [shape: bf16[32,96], index: 3, kind: input, shape index: {}]
  %s4 = inlined_call_operand.vmem [shape: f32[1,96], index: 4, kind: input, shape index: {}]
  %s5 = inlined_call_operand.vmem [shape: bf16[32,32], index: 5, kind: input, shape index: {}]
  %s6 = inlined_call_operand.vmem [shape: f32[1,32], index: 6, kind: input, shape index: {}]
  %s7 = inlined_call_operand.vmem [shape: f32[1,32], index: 7, kind: input, shape index: {}]
  %s8 = inlined_call_operand.vmem [shape: f32[1,32], index: 8, kind: input, shape index: {}]
  %s9 = inlined_call_operand.hbm [shape: bf16[32,64], index: 9, kind: input, shape index: {}]
  %s10 = inlined_call_operand.vmem [shape: f32[1,64], index: 10, kind: input, shape index: {}]
  %s11 = inlined_call_operand.vmem [shape: bf16[64,32], index: 11, kind: input, shape index: {}]
  %s12 = inlined_call_operand.vmem [shape: f32[1,32], index: 12, kind: input, shape index: {}]
  %s13 = inlined_call_operand.vmem [shape: f32[1,32], index: 13, kind: input, shape index: {}]
  %s14 = inlined_call_operand.vmem [shape: f32[1,32], index: 14, kind: input, shape index: {}]
  %s15 = inlined_call_operand.hbm [shape: f32[2,8,32], index: 15, kind: output, shape index: {}]
  %s16 = sld [smem:[#allocation0]]
  $region105: #{tpu_custom_call.1} parent=0
    _
  %s18 = ssub.s32 1, %s16
  %s19 = scalar_select 0, %s18, %s16
  $region1: #{tpu_custom_call.1} parent=0
    #allocation3 [shape = 'u8[1024]{0}', space=vmem, size = 0x400, scoped, tag = 'input window, operand 1']
    #allocation4 [shape = 's32[2]{0}', space=sflag, size = 0x8, scoped, tag = 'scoped memory for tpu_custom_call.1']
    #allocation5 [shape = 's32[2]{0}', space=sflag, size = 0x8, scoped, tag = 'scoped memory for tpu_custom_call.1']
    #allocation6 [shape = 'u8[4096]{0}', space=vmem, size = 0x1000, scoped, tag = 'input window, operand 2, single buffered']
    #allocation7 [shape = 's32[1]{0}', space=sflag, size = 0x4, scoped, tag = 'scoped memory for tpu_custom_call.1']
    #allocation8 [shape = 'u8[8192]{0}', space=vmem, size = 0x2000, scoped, tag = 'input window, operand 9, single buffered']
    #allocation9 [shape = 'u8[8192]{0}', space=vmem, size = 0x2000, scoped, tag = 'output window, operand 0']
    %20 = vsyncpa [#allocation4], 0
    %s21 = scalar_lea.sflag [#allocation4], 1
    %22 = vsyncpa %s21, 0
    %23 = vsyncpa [#allocation7], 0
    %24 = vsyncpa [#allocation5], 0
    %s25 = scalar_lea.sflag [#allocation5], 1
    %26 = vsyncpa %s25, 0
    loop: start=0, step=1, limit=4
    $region2: #{tpu_custom_call.1} parent=1 // loop_pre_header
      _
    $region3: #{tpu_custom_call.1} parent=1 // loop_header
      %s28 = sphi 0, %s32
      %p29 = scmp.ge.s32.totalorder %s28, 4
      %s38 = sphi 0, %s40
      %s41 = sphi 0, %s38
      %s42 = sphi 0, %s41
      %s58 = sphi 0, %s42
      %s64 = sphi 0, %s66
      %s67 = sphi 0, %s64
      %s68 = sphi 0, %s67
      %s84 = sphi 0, %s68
      %s88 = sphi 0, %s88
      %s90 = sphi 0, %s88
      %s91 = sphi 0, %s90
      %s105 = sphi 0, %s91
      %s109 = sphi 0, %s109
      %s111 = sphi 0, %s109
      %s112 = sphi 0, %s111
      %s126 = sphi 0, %s112
      %s130 = sphi 0, %s130
      %s132 = sphi 0, %s130
      %s133 = sphi 0, %s132
      %s147 = sphi 0, %s133
      %s151 = sphi 0, %s151
      %s153 = sphi 0, %s151
      %s154 = sphi 0, %s153
      %s168 = sphi 0, %s154
      %s172 = sphi 0, %s172
      %s174 = sphi 0, %s172
      %s175 = sphi 0, %s174
      %s189 = sphi 0, %s175
      %s193 = sphi 0, %s193
      %s195 = sphi 0, %s193
      %s196 = sphi 0, %s195
      %s210 = sphi 0, %s196
      %s214 = sphi 0, %s214
      %s216 = sphi 0, %s214
      %s217 = sphi 0, %s216
      %s231 = sphi 0, %s217
      %s235 = sphi 0, %s235
      %s237 = sphi 0, %s235
      %s238 = sphi 0, %s237
      %s252 = sphi 0, %s238
      %s256 = sphi 0, %s256
      %s258 = sphi 0, %s256
      %s259 = sphi 0, %s258
      %s273 = sphi 0, %s259
      %s277 = sphi 0, %s277
      %s279 = sphi 0, %s277
      %s280 = sphi 0, %s279
      %s294 = sphi 0, %s280
      %s298 = sphi 0, %s298
      %s300 = sphi 0, %s298
      %s301 = sphi 0, %s300
      %s315 = sphi 0, %s301
      %s319 = sphi 0, %s319
      %s321 = sphi 0, %s319
      %s322 = sphi 0, %s321
      %s336 = sphi 0, %s322
      %s340 = sphi 0, %s340
      %s342 = sphi 0, %s340
      %s343 = sphi 0, %s342
      %s357 = sphi 0, %s343
      %s363 = sphi 0, %s365
      %s366 = sphi 0, %s363
      %s367 = sphi 0, %s366
      %s383 = sphi 0, %s367
    $region4: #{tpu_custom_call.1} parent=1 // loop_header_branch
      %31 = sbr.rel (%p29) target = $region8
    $region5: #{tpu_custom_call.1} parent=1 // loop_body
      %s33 = ssub.s32 %s28, 1
      %s34 = ssub.s32 %s28, 2
      %s35 = sadd.s32 %s28, 1
      %s36 = ssub.s32 %s28, %s35
      %p37 = scmp.eq.s32.totalorder %s36, 0
      %s39 = sadd.s32 %s38, 1
      %s40 = scalar_select %p37, %s38, %s39
      %p43 = pneg %p37
      %p44 = scmp.eq.s32.totalorder %s28, 1
      %p45 = por %p43, %p44
      %p46 = scmp.ne.s32.totalorder %s38, %s41
      %p47 = scmp.eq.s32.totalorder %s28, 0
      %p48 = por %p46, %p47
      %p49 = scmp.ne.s32.totalorder %s38, %s41
      %p50 = scmp.eq.s32.totalorder %s33, 1
      %p51 = por %p49, %p50
      %p52 = scmp.ne.s32.totalorder %s41, %s42
      %p53 = scmp.eq.s32.totalorder %s33, 0
      %p54 = por %p52, %p53
      %p55 = scmp.ne.s32.totalorder %s41, %s42
      %p56 = scmp.eq.s32.totalorder %s34, 1
      %p57 = por %p55, %p56
      %p59 = scmp.ne.s32.totalorder %s42, %s58
      %p60 = scmp.eq.s32.totalorder %s34, 0
      %p61 = por %p59, %p60
      %s62 = ssub.s32 %s28, %s35
      %p63 = scmp.eq.s32.totalorder %s62, 0
      %s65 = sadd.s32 %s64, 1
      %s66 = scalar_select %p63, %s64, %s65
      %p69 = pneg %p63
      %p70 = scmp.eq.s32.totalorder %s28, 1
      %p71 = por %p69, %p70
      %p72 = scmp.ne.s32.totalorder %s64, %s67
      %p73 = scmp.eq.s32.totalorder %s28, 0
      %p74 = por %p72, %p73
      %p75 = scmp.ne.s32.totalorder %s64, %s67
      %p76 = scmp.eq.s32.totalorder %s33, 1
      %p77 = por %p75, %p76
      %p78 = scmp.ne.s32.totalorder %s67, %s68
      %p79 = scmp.eq.s32.totalorder %s33, 0
      %p80 = por %p78, %p79
      %p81 = scmp.ne.s32.totalorder %s67, %s68
      %p82 = scmp.eq.s32.totalorder %s34, 1
      %p83 = por %p81, %p82
      %p85 = scmp.ne.s32.totalorder %s68, %s84
      %p86 = scmp.eq.s32.totalorder %s34, 0
      %p87 = por %p85, %p86
      %s89 = sadd.s32 %s88, 1
      %p92 = scmp.eq.s32.totalorder %s28, 1
      %p93 = scmp.ne.s32.totalorder %s88, %s90
      %p94 = scmp.eq.s32.totalorder %s28, 0
      %p95 = por %p93, %p94
      %p96 = scmp.ne.s32.totalorder %s88, %s90
      %p97 = scmp.eq.s32.totalorder %s33, 1
      %p98 = por %p96, %p97
      %p99 = scmp.ne.s32.totalorder %s90, %s91
      %p100 = scmp.eq.s32.totalorder %s33, 0
      %p101 = por %p99, %p100
      %p102 = scmp.ne.s32.totalorder %s90, %s91
      %p103 = scmp.eq.s32.totalorder %s34, 1
      %p104 = por %p102, %p103
      %p106 = scmp.ne.s32.totalorder %s91, %s105
      %p107 = scmp.eq.s32.totalorder %s34, 0
      %p108 = por %p106, %p107
      %s110 = sadd.s32 %s109, 1
      %p113 = scmp.eq.s32.totalorder %s28, 1
      %p114 = scmp.ne.s32.totalorder %s109, %s111
      %p115 = scmp.eq.s32.totalorder %s28, 0
      %p116 = por %p114, %p115
      %p117 = scmp.ne.s32.totalorder %s109, %s111
      %p118 = scmp.eq.s32.totalorder %s33, 1
      %p119 = por %p117, %p118
      %p120 = scmp.ne.s32.totalorder %s111, %s112
      %p121 = scmp.eq.s32.totalorder %s33, 0
      %p122 = por %p120, %p121
      %p123 = scmp.ne.s32.totalorder %s111, %s112
      %p124 = scmp.eq.s32.totalorder %s34, 1
      %p125 = por %p123, %p124
      %p127 = scmp.ne.s32.totalorder %s112, %s126
      %p128 = scmp.eq.s32.totalorder %s34, 0
      %p129 = por %p127, %p128
      %s131 = sadd.s32 %s130, 1
      %p134 = scmp.eq.s32.totalorder %s28, 1
      %p135 = scmp.ne.s32.totalorder %s130, %s132
      %p136 = scmp.eq.s32.totalorder %s28, 0
      %p137 = por %p135, %p136
      %p138 = scmp.ne.s32.totalorder %s130, %s132
      %p139 = scmp.eq.s32.totalorder %s33, 1
      %p140 = por %p138, %p139
      %p141 = scmp.ne.s32.totalorder %s132, %s133
      %p142 = scmp.eq.s32.totalorder %s33, 0
      %p143 = por %p141, %p142
      %p144 = scmp.ne.s32.totalorder %s132, %s133
      %p145 = scmp.eq.s32.totalorder %s34, 1
      %p146 = por %p144, %p145
      %p148 = scmp.ne.s32.totalorder %s133, %s147
      %p149 = scmp.eq.s32.totalorder %s34, 0
      %p150 = por %p148, %p149
      %s152 = sadd.s32 %s151, 1
      %p155 = scmp.eq.s32.totalorder %s28, 1
      %p156 = scmp.ne.s32.totalorder %s151, %s153
      %p157 = scmp.eq.s32.totalorder %s28, 0
      %p158 = por %p156, %p157
      %p159 = scmp.ne.s32.totalorder %s151, %s153
      %p160 = scmp.eq.s32.totalorder %s33, 1
      %p161 = por %p159, %p160
      %p162 = scmp.ne.s32.totalorder %s153, %s154
      %p163 = scmp.eq.s32.totalorder %s33, 0
      %p164 = por %p162, %p163
      %p165 = scmp.ne.s32.totalorder %s153, %s154
      %p166 = scmp.eq.s32.totalorder %s34, 1
      %p167 = por %p165, %p166
      %p169 = scmp.ne.s32.totalorder %s154, %s168
      %p170 = scmp.eq.s32.totalorder %s34, 0
      %p171 = por %p169, %p170
      %s173 = sadd.s32 %s172, 1
      %p176 = scmp.eq.s32.totalorder %s28, 1
      %p177 = scmp.ne.s32.totalorder %s172, %s174
      %p178 = scmp.eq.s32.totalorder %s28, 0
      %p179 = por %p177, %p178
      %p180 = scmp.ne.s32.totalorder %s172, %s174
      %p181 = scmp.eq.s32.totalorder %s33, 1
      %p182 = por %p180, %p181
      %p183 = scmp.ne.s32.totalorder %s174, %s175
      %p184 = scmp.eq.s32.totalorder %s33, 0
      %p185 = por %p183, %p184
      %p186 = scmp.ne.s32.totalorder %s174, %s175
      %p187 = scmp.eq.s32.totalorder %s34, 1
      %p188 = por %p186, %p187
      %p190 = scmp.ne.s32.totalorder %s175, %s189
      %p191 = scmp.eq.s32.totalorder %s34, 0
      %p192 = por %p190, %p191
      %s194 = sadd.s32 %s193, 1
      %p197 = scmp.eq.s32.totalorder %s28, 1
      %p198 = scmp.ne.s32.totalorder %s193, %s195
      %p199 = scmp.eq.s32.totalorder %s28, 0
      %p200 = por %p198, %p199
      %p201 = scmp.ne.s32.totalorder %s193, %s195
      %p202 = scmp.eq.s32.totalorder %s33, 1
      %p203 = por %p201, %p202
      %p204 = scmp.ne.s32.totalorder %s195, %s196
      %p205 = scmp.eq.s32.totalorder %s33, 0
      %p206 = por %p204, %p205
      %p207 = scmp.ne.s32.totalorder %s195, %s196
      %p208 = scmp.eq.s32.totalorder %s34, 1
      %p209 = por %p207, %p208
      %p211 = scmp.ne.s32.totalorder %s196, %s210
      %p212 = scmp.eq.s32.totalorder %s34, 0
      %p213 = por %p211, %p212
      %s215 = sadd.s32 %s214, 1
      %p218 = scmp.eq.s32.totalorder %s28, 1
      %p219 = scmp.ne.s32.totalorder %s214, %s216
      %p220 = scmp.eq.s32.totalorder %s28, 0
      %p221 = por %p219, %p220
      %p222 = scmp.ne.s32.totalorder %s214, %s216
      %p223 = scmp.eq.s32.totalorder %s33, 1
      %p224 = por %p222, %p223
      %p225 = scmp.ne.s32.totalorder %s216, %s217
      %p226 = scmp.eq.s32.totalorder %s33, 0
      %p227 = por %p225, %p226
      %p228 = scmp.ne.s32.totalorder %s216, %s217
      %p229 = scmp.eq.s32.totalorder %s34, 1
      %p230 = por %p228, %p229
      %p232 = scmp.ne.s32.totalorder %s217, %s231
      %p233 = scmp.eq.s32.totalorder %s34, 0
      %p234 = por %p232, %p233
      %s236 = sadd.s32 %s235, 1
      %p239 = scmp.eq.s32.totalorder %s28, 1
      %p240 = scmp.ne.s32.totalorder %s235, %s237
      %p241 = scmp.eq.s32.totalorder %s28, 0
      %p242 = por %p240, %p241
      %p243 = scmp.ne.s32.totalorder %s235, %s237
      %p244 = scmp.eq.s32.totalorder %s33, 1
      %p245 = por %p243, %p244
      %p246 = scmp.ne.s32.totalorder %s237, %s238
      %p247 = scmp.eq.s32.totalorder %s33, 0
      %p248 = por %p246, %p247
      %p249 = scmp.ne.s32.totalorder %s237, %s238
      %p250 = scmp.eq.s32.totalorder %s34, 1
      %p251 = por %p249, %p250
      %p253 = scmp.ne.s32.totalorder %s238, %s252
      %p254 = scmp.eq.s32.totalorder %s34, 0
      %p255 = por %p253, %p254
      %s257 = sadd.s32 %s256, 1
      %p260 = scmp.eq.s32.totalorder %s28, 1
      %p261 = scmp.ne.s32.totalorder %s256, %s258
      %p262 = scmp.eq.s32.totalorder %s28, 0
      %p263 = por %p261, %p262
      %p264 = scmp.ne.s32.totalorder %s256, %s258
      %p265 = scmp.eq.s32.totalorder %s33, 1
      %p266 = por %p264, %p265
      %p267 = scmp.ne.s32.totalorder %s258, %s259
      %p268 = scmp.eq.s32.totalorder %s33, 0
      %p269 = por %p267, %p268
      %p270 = scmp.ne.s32.totalorder %s258, %s259
      %p271 = scmp.eq.s32.totalorder %s34, 1
      %p272 = por %p270, %p271
      %p274 = scmp.ne.s32.totalorder %s259, %s273
      %p275 = scmp.eq.s32.totalorder %s34, 0
      %p276 = por %p274, %p275
      %s278 = sadd.s32 %s277, 1
      %p281 = scmp.eq.s32.totalorder %s28, 1
      %p282 = scmp.ne.s32.totalorder %s277, %s279
      %p283 = scmp.eq.s32.totalorder %s28, 0
      %p284 = por %p282, %p283
      %p285 = scmp.ne.s32.totalorder %s277, %s279
      %p286 = scmp.eq.s32.totalorder %s33, 1
      %p287 = por %p285, %p286
      %p288 = scmp.ne.s32.totalorder %s279, %s280
      %p289 = scmp.eq.s32.totalorder %s33, 0
      %p290 = por %p288, %p289
      %p291 = scmp.ne.s32.totalorder %s279, %s280
      %p292 = scmp.eq.s32.totalorder %s34, 1
      %p293 = por %p291, %p292
      %p295 = scmp.ne.s32.totalorder %s280, %s294
      %p296 = scmp.eq.s32.totalorder %s34, 0
      %p297 = por %p295, %p296
      %s299 = sadd.s32 %s298, 1
      %p302 = scmp.eq.s32.totalorder %s28, 1
      %p303 = scmp.ne.s32.totalorder %s298, %s300
      %p304 = scmp.eq.s32.totalorder %s28, 0
      %p305 = por %p303, %p304
      %p306 = scmp.ne.s32.totalorder %s298, %s300
      %p307 = scmp.eq.s32.totalorder %s33, 1
      %p308 = por %p306, %p307
      %p309 = scmp.ne.s32.totalorder %s300, %s301
      %p310 = scmp.eq.s32.totalorder %s33, 0
      %p311 = por %p309, %p310
      %p312 = scmp.ne.s32.totalorder %s300, %s301
      %p313 = scmp.eq.s32.totalorder %s34, 1
      %p314 = por %p312, %p313
      %p316 = scmp.ne.s32.totalorder %s301, %s315
      %p317 = scmp.eq.s32.totalorder %s34, 0
      %p318 = por %p316, %p317
      %s320 = sadd.s32 %s319, 1
      %p323 = scmp.eq.s32.totalorder %s28, 1
      %p324 = scmp.ne.s32.totalorder %s319, %s321
      %p325 = scmp.eq.s32.totalorder %s28, 0
      %p326 = por %p324, %p325
      %p327 = scmp.ne.s32.totalorder %s319, %s321
      %p328 = scmp.eq.s32.totalorder %s33, 1
      %p329 = por %p327, %p328
      %p330 = scmp.ne.s32.totalorder %s321, %s322
      %p331 = scmp.eq.s32.totalorder %s33, 0
      %p332 = por %p330, %p331
      %p333 = scmp.ne.s32.totalorder %s321, %s322
      %p334 = scmp.eq.s32.totalorder %s34, 1
      %p335 = por %p333, %p334
      %p337 = scmp.ne.s32.totalorder %s322, %s336
      %p338 = scmp.eq.s32.totalorder %s34, 0
      %p339 = por %p337, %p338
      %s341 = sadd.s32 %s340, 1
      %p344 = scmp.eq.s32.totalorder %s28, 1
      %p345 = scmp.ne.s32.totalorder %s340, %s342
      %p346 = scmp.eq.s32.totalorder %s28, 0
      %p347 = por %p345, %p346
      %p348 = scmp.ne.s32.totalorder %s340, %s342
      %p349 = scmp.eq.s32.totalorder %s33, 1
      %p350 = por %p348, %p349
      %p351 = scmp.ne.s32.totalorder %s342, %s343
      %p352 = scmp.eq.s32.totalorder %s33, 0
      %p353 = por %p351, %p352
      %p354 = scmp.ne.s32.totalorder %s342, %s343
      %p355 = scmp.eq.s32.totalorder %s34, 1
      %p356 = por %p354, %p355
      %p358 = scmp.ne.s32.totalorder %s343, %s357
      %p359 = scmp.eq.s32.totalorder %s34, 0
      %p360 = por %p358, %p359
      %s361 = ssub.s32 %s28, %s35
      %p362 = scmp.eq.s32.totalorder %s361, 0
      %s364 = sadd.s32 %s363, 1
      %s365 = scalar_select %p362, %s363, %s364
      %p368 = pneg %p362
      %p369 = scmp.eq.s32.totalorder %s28, 1
      %p370 = por %p368, %p369
      %p371 = scmp.ne.s32.totalorder %s363, %s366
      %p372 = scmp.eq.s32.totalorder %s28, 0
      %p373 = por %p371, %p372
      %p374 = scmp.ne.s32.totalorder %s363, %s366
      %p375 = scmp.eq.s32.totalorder %s33, 1
      %p376 = por %p374, %p375
      %p377 = scmp.ne.s32.totalorder %s366, %s367
      %p378 = scmp.eq.s32.totalorder %s33, 0
      %p379 = por %p377, %p378
      %p380 = scmp.ne.s32.totalorder %s366, %s367
      %p381 = scmp.eq.s32.totalorder %s34, 1
      %p382 = por %p380, %p381
      %p384 = scmp.ne.s32.totalorder %s367, %s383
      %p385 = scmp.eq.s32.totalorder %s34, 0
      %p386 = por %p384, %p385
      %p387 = scmp.le.s32.totalorder 1, %s28
      %p388 = scmp.lt.s32.totalorder %s28, 3
      %p389 = pnand %p387, %p388
      %p390 = pneg %p389
      // Predicated region
      $region9: #{tpu_custom_call.1} parent=5 // pred_check
        _
      $region10: #{tpu_custom_call.1} parent=5 // pred_check_branch
        %392 = sbr.rel (%p389) target = $region12
      $region11: #{tpu_custom_call.1} parent=5 // pred_region
        %s393 = ssub.s32 %s28, 1
        // Predicated region
        $region13: #{tpu_custom_call.1} parent=11 // pred_check
          %p394 = pneg %p101
        $region14: #{tpu_custom_call.1} parent=11 // pred_check_branch
          %396 = sbr.rel (%p394) target = $region16
        $region15: #{tpu_custom_call.1} parent=11 // pred_region
          %398 = vsyncadd [#allocation7], 0
          %s400 = sshll.u32 %s2, 4
          %s401 = int_to_ptr.hbm [resolvable:$true] %s400
          %s402 = sshll.u32 [#allocation6], 4
          %s403 = int_to_ptr.vmem [resolvable:$true] %s402
          %405 = dma.hbm_to_vmem [thread:$0]  %s401, 128, %s403, [#allocation7]
        $region16: #{tpu_custom_call.1} parent=11 // pred_fallthru
          _
        // Predicated region
        $region17: #{tpu_custom_call.1} parent=11 // pred_check
          %p406 = pneg %p122
        $region18: #{tpu_custom_call.1} parent=11 // pred_check_branch
          %408 = sbr.rel (%p406) target = $region20
        $region19: #{tpu_custom_call.1} parent=11 // pred_region
          _
        $region20: #{tpu_custom_call.1} parent=11 // pred_fallthru
          _
        // Predicated region
        $region21: #{tpu_custom_call.1} parent=11 // pred_check
          %p409 = pneg %p143
        $region22: #{tpu_custom_call.1} parent=11 // pred_check_branch
          %411 = sbr.rel (%p409) target = $region24
        $region23: #{tpu_custom_call.1} parent=11 // pred_region
          _
        $region24: #{tpu_custom_call.1} parent=11 // pred_fallthru
          _
        // Predicated region
        $region25: #{tpu_custom_call.1} parent=11 // pred_check
          %p412 = pneg %p164
        $region26: #{tpu_custom_call.1} parent=11 // pred_check_branch
          %414 = sbr.rel (%p412) target = $region28
        $region27: #{tpu_custom_call.1} parent=11 // pred_region
          _
        $region28: #{tpu_custom_call.1} parent=11 // pred_fallthru
          _
        // Predicated region
        $region29: #{tpu_custom_call.1} parent=11 // pred_check
          %p415 = pneg %p185
        $region30: #{tpu_custom_call.1} parent=11 // pred_check_branch
          %417 = sbr.rel (%p415) target = $region32
        $region31: #{tpu_custom_call.1} parent=11 // pred_region
          _
        $region32: #{tpu_custom_call.1} parent=11 // pred_fallthru
          _
        // Predicated region
        $region33: #{tpu_custom_call.1} parent=11 // pred_check
          %p418 = pneg %p206
        $region34: #{tpu_custom_call.1} parent=11 // pred_check_branch
          %420 = sbr.rel (%p418) target = $region36
        $region35: #{tpu_custom_call.1} parent=11 // pred_region
          _
        $region36: #{tpu_custom_call.1} parent=11 // pred_fallthru
          _
        // Predicated region
        $region37: #{tpu_custom_call.1} parent=11 // pred_check
          %p421 = pneg %p227
        $region38: #{tpu_custom_call.1} parent=11 // pred_check_branch
          %423 = sbr.rel (%p421) target = $region40
        $region39: #{tpu_custom_call.1} parent=11 // pred_region
          _
        $region40: #{tpu_custom_call.1} parent=11 // pred_fallthru
          _
        // Predicated region
        $region41: #{tpu_custom_call.1} parent=11 // pred_check
          %p424 = pneg %p248
        $region42: #{tpu_custom_call.1} parent=11 // pred_check_branch
          %426 = sbr.rel (%p424) target = $region44
        $region43: #{tpu_custom_call.1} parent=11 // pred_region
          %428 = vsyncadd [#allocation7], 0
          %s429 = sshll.u32 %s9, 4
          %s430 = int_to_ptr.hbm [resolvable:$true] %s429
          %s431 = sshll.u32 [#allocation8], 4
          %s432 = int_to_ptr.vmem [resolvable:$true] %s431
          %437 = dma.hbm_to_vmem [thread:$0]  %s430, 256, %s432, [#allocation7], 64, 64, 4
        $region44: #{tpu_custom_call.1} parent=11 // pred_fallthru
          _
        // Predicated region
        $region45: #{tpu_custom_call.1} parent=11 // pred_check
          %p438 = pneg %p269
        $region46: #{tpu_custom_call.1} parent=11 // pred_check_branch
          %440 = sbr.rel (%p438) target = $region48
        $region47: #{tpu_custom_call.1} parent=11 // pred_region
          _
        $region48: #{tpu_custom_call.1} parent=11 // pred_fallthru
          _
        // Predicated region
        $region49: #{tpu_custom_call.1} parent=11 // pred_check
          %p441 = pneg %p290
        $region50: #{tpu_custom_call.1} parent=11 // pred_check_branch
          %443 = sbr.rel (%p441) target = $region52
        $region51: #{tpu_custom_call.1} parent=11 // pred_region
          _
        $region52: #{tpu_custom_call.1} parent=11 // pred_fallthru
          _
        // Predicated region
        $region53: #{tpu_custom_call.1} parent=11 // pred_check
          %p444 = pneg %p311
        $region54: #{tpu_custom_call.1} parent=11 // pred_check_branch
          %446 = sbr.rel (%p444) target = $region56
        $region55: #{tpu_custom_call.1} parent=11 // pred_region
          _
        $region56: #{tpu_custom_call.1} parent=11 // pred_fallthru
          _
        // Predicated region
        $region57: #{tpu_custom_call.1} parent=11 // pred_check
          %p447 = pneg %p332
        $region58: #{tpu_custom_call.1} parent=11 // pred_check_branch
          %449 = sbr.rel (%p447) target = $region60
        $region59: #{tpu_custom_call.1} parent=11 // pred_region
          _
        $region60: #{tpu_custom_call.1} parent=11 // pred_fallthru
          _
        // Predicated region
        $region61: #{tpu_custom_call.1} parent=11 // pred_check
          %p450 = pneg %p353
        $region62: #{tpu_custom_call.1} parent=11 // pred_check_branch
          %452 = sbr.rel (%p450) target = $region64
        $region63: #{tpu_custom_call.1} parent=11 // pred_region
          _
        $region64: #{tpu_custom_call.1} parent=11 // pred_fallthru
          _
      $region12: #{tpu_custom_call.1} parent=5 // pred_fallthru
        _
      %p453 = scmp.lt.s32.totalorder %s28, 2
      // Predicated region
      $region65: #{tpu_custom_call.1} parent=5 // pred_check
        %p454 = pneg %p453
      $region66: #{tpu_custom_call.1} parent=5 // pred_check_branch
        %456 = sbr.rel (%p454) target = $region68
      $region67: #{tpu_custom_call.1} parent=5 // pred_region
        // Predicated region
        $region69: #{tpu_custom_call.1} parent=67 // pred_check
          %p457 = pneg %p48
        $region70: #{tpu_custom_call.1} parent=67 // pred_check_branch
          %459 = sbr.rel (%p457) target = $region72
        $region71: #{tpu_custom_call.1} parent=67 // pred_region
          %p460 = scmp.lt.s32.totalorder %s28, 1
          %s461 = scalar_select %p460, %s28, 1
          %s462 = smul.addr %s461, 8
          %s463 = scalar_lea.vmem %s0, %s462
        $region72: #{tpu_custom_call.1} parent=67 // pred_fallthru
          _
        // Predicated region
        $region73: #{tpu_custom_call.1} parent=67 // pred_check
          %p464 = pneg %p74
        $region74: #{tpu_custom_call.1} parent=67 // pred_check_branch
          %466 = sbr.rel (%p464) target = $region76
        $region75: #{tpu_custom_call.1} parent=67 // pred_region
          %s467 = sand.u32 %s64, 1
          %s468 = scalar_lea.sflag [#allocation4], %s467
          %s469 = sand.u32 %s64, 1
          %s470 = scalar_lea.vmem [#allocation3], %s469
          %472 = vsyncadd %s468, 0
          %s473 = scalar_lea.hbm %s1, %s28
          %s475 = sshll.u32 %s473, 4
          %s476 = int_to_ptr.hbm [resolvable:$true] %s475
          %s477 = sshll.u32 %s470, 4
          %s478 = int_to_ptr.vmem [resolvable:$true] %s477
          %480 = dma.hbm_to_vmem [thread:$0]  %s476, 16, %s478, %s468
        $region76: #{tpu_custom_call.1} parent=67 // pred_fallthru
          _
      $region68: #{tpu_custom_call.1} parent=5 // pred_fallthru
        _
      %p481 = scmp.le.s32.totalorder 1, %s28
      %p482 = scmp.lt.s32.totalorder %s28, 3
      %p483 = pnand %p481, %p482
      %p484 = pneg %p483
      // Predicated region
      $region77: #{tpu_custom_call.1} parent=5 // pred_check
        _
      $region78: #{tpu_custom_call.1} parent=5 // pred_check_branch
        %486 = sbr.rel (%p483) target = $region80
      $region79: #{tpu_custom_call.1} parent=5 // pred_region
        %s487 = ssub.s32 %s28, 1
        %s488 = sand.u32 %s67, 1
        %s489 = scalar_lea.sflag [#allocation4], %s488
        %s490 = sand.u32 %s67, 1
        %s491 = scalar_lea.vmem [#allocation3], %s490
        // Predicated region
        $region81: #{tpu_custom_call.1} parent=79 // pred_check
          %p492 = pneg %p80
        $region82: #{tpu_custom_call.1} parent=79 // pred_check_branch
          %494 = sbr.rel (%p492) target = $region84
        $region83: #{tpu_custom_call.1} parent=79 // pred_region
          %496 = dma.done %s489, 16
        $region84: #{tpu_custom_call.1} parent=79 // pred_fallthru
          _
        // Predicated region
        $region85: #{tpu_custom_call.1} parent=79 // pred_check
          %p497 = pneg %p101
        $region86: #{tpu_custom_call.1} parent=79 // pred_check_branch
          %499 = sbr.rel (%p497) target = $region88
        $region87: #{tpu_custom_call.1} parent=79 // pred_region
          %501 = dma.done [#allocation7], 128
        $region88: #{tpu_custom_call.1} parent=79 // pred_fallthru
          _
        // Predicated region
        $region89: #{tpu_custom_call.1} parent=79 // pred_check
          %p502 = pneg %p248
        $region90: #{tpu_custom_call.1} parent=79 // pred_check_branch
          %504 = sbr.rel (%p502) target = $region92
        $region91: #{tpu_custom_call.1} parent=79 // pred_region
          %506 = dma.done [#allocation7], 256
        $region92: #{tpu_custom_call.1} parent=79 // pred_fallthru
          _
        %p507 = scmp.lt.s32.totalorder %s33, 1
        %s508 = scalar_select %p507, %s33, 1
        %s509 = smul.addr %s508, 8
        %s510 = scalar_lea.vmem %s0, %s509
        %p511 = pneg %p54
        %p512 = pneg %p51
        %s513 = sand.u32 %s67, 1
        %s514 = scalar_lea.sflag [#allocation4], %s513
        %s515 = sand.u32 %s67, 1
        %s516 = scalar_lea.vmem [#allocation3], %s515
        %p517 = pneg %p80
        %p518 = pneg %p77
        %p519 = pneg %p101
        %p520 = pneg %p98
        %p521 = pneg %p122
        %p522 = pneg %p119
        %p523 = pneg %p143
        %p524 = pneg %p140
        %p525 = pneg %p164
        %p526 = pneg %p161
        %p527 = pneg %p185
        %p528 = pneg %p182
        %p529 = pneg %p206
        %p530 = pneg %p203
        %p531 = pneg %p227
        %p532 = pneg %p224
        %p533 = pneg %p248
        %p534 = pneg %p245
        %p535 = pneg %p269
        %p536 = pneg %p266
        %p537 = pneg %p290
        %p538 = pneg %p287
        %p539 = pneg %p311
        %p540 = pneg %p308
        %p541 = pneg %p332
        %p542 = pneg %p329
        %p543 = pneg %p353
        %p544 = pneg %p350
        %p545 = pneg %p379
        %p546 = pneg %p376
        %s547 = sand.u32 %s366, 1
        %s548 = scalar_lea.sflag [#allocation5], %s547
        %s549 = sand.u32 %s366, 1
        %s550 = smul.addr %s549, 8
        %s551 = scalar_lea.vmem [#allocation9], %s550
        %p552 = scmp.lt.s32.totalorder %s33, 1
        %s553 = scalar_select %p552, %s33, 1
        %s554 = smul.addr %s553, 8
        %s555 = scalar_lea.vmem %s0, %s554
        %v557 = vld [vmem:[%s555] sm:$0xff]
        %v558 = vmul.f32 %v557, 5.656854
        %v559 = vld [vmem:[#allocation6] sm:$0xff]
        %v560 = vadd.f32 %v558, %v559
        %v561 = vpack.c.bf16 %v560, %v560
        %v562 = vld [vmem:[%s3] sm:$0xf]
        %v563 = vld [vmem:[%s3 + $0x4] sm:$0xf]
        %v564 = vld [vmem:[%s3 + $0x8] sm:$0xf]
        %v565 = vld [vmem:[%s3 + $0xc] sm:$0xf]
        %v566 = vld [vmem:[%s4] sm:$0x1]
        %v568 = vperm.slane %v566, 0
        %v574 = vunpack.c.l.b16 %v562
        %v575 = vunpack.c.l.b16 %v563
        %v576 = vunpack.c.l.b16 %v564
        %v577 = vunpack.c.l.b16 %v565
        %v578 = vpack.c.b16 %v575, %v574
        %v579 = vpack.c.b16 %v577, %v576
        %vm582 = vcmask 261120
        %v584 = vsel %vm582, %v561, 0
        %586 = vmatpush.bf16.msra.mxu0 0
        %587 = vmatpush.bf16.msra.mxu0 0
        %588 = vmatpush.bf16.msra.mxu0 0
        %589 = vmatpush.bf16.msra.mxu0 0
        %590 = vmatpush.bf16.msra.mxu0 0
        %591 = vmatpush.bf16.msra.mxu0 0
        %592 = vmatpush.bf16.msra.mxu0 %v579
        %593 = vmatpush.bf16.msra.mxu0 %v578
        %594 = vmatmul.bf16.gmra.mxu0 %v584
        %v595 = vpop.f32.mrf.mxu0
        %v596 = vadd.f32 %v568, %v595
        %v597 = vpop.f32.mrf.mxu0
        %598 = vdwg.mxu0
        %v599 = vld [vmem:[%s491] sm:$0x1]
        %vm600 = vcmp.gt.f32.partialorder %v599, 0.5
        %v601 = vsel %vm600, -1e+30, 0.0
        %v602 = vpack.c.bf16 %v596, %v596
        %v604 = vperm.slane %v601, 0
        %v607 = vunpack.c.l.b16 %v602
        %v608 = vpack.c.b16 %v607, %v607
        %609 = vrot.lane.b32.xlu0 %v608, 96
        %v610 = vpop.permute.xlu0 %609
        %vm611 = vcmask 64512
        %v613 = vsel %vm611, %v602, 0
        %v616 = vsel %vm611, %v610, 0
        %618 = vmatpush.bf16.xpose.msra.mxu0 0
        %619 = vmatpush.bf16.xpose.msra.mxu0 0
        %620 = vmatpush.bf16.xpose.msra.mxu0 0
        %621 = vmatpush.bf16.xpose.msra.mxu0 0
        %622 = vmatpush.bf16.xpose.msra.mxu0 0
        %623 = vmatpush.bf16.xpose.msra.mxu0 0
        %624 = vmatpush.bf16.xpose.msra.mxu0 0
        %625 = vmatpush.bf16.xpose.msra.mxu0 %v616
        %626 = vmatmul.bf16.gmra.mxu0 %v613
        %v627 = vpop.f32.mrf.mxu0
        %v628 = vadd.f32 %v604, %v627
        %v629 = vpop.f32.mrf.mxu0
        %630 = vdwg.mxu0
        %v631 = vsel %vm611, %v628, -inf
        %632 = vmax.xlane.f32.xlu0 %v631
        %v633 = vpop.xlane.xlu0 %632
        %v634 = vsub.f32 %v628, %v633
        %v635 = vmul.f32 %v634, 1.442695
        %v636 = vpow.pop %v635
        %v637 = vsel %vm611, %v636, 0.0
        %638 = vadd.xlane.f32.xlu0 %v637
        %v639 = vpop.xlane.xlu0 %638
        %v640 = vpack.c.bf16 %v636, %v636
        %641 = vrot.lane.b32.xlu0 %v608, 64
        %v642 = vpop.permute.xlu0 %641
        %v644 = vsel %vm611, %v640, 0
        %vm646 = vcmask 1043456
        %v648 = vsel %vm646, %v642, 0
        %650 = vmatpush.bf16.msra.mxu0 0
        %651 = vmatpush.bf16.msra.mxu0 0
        %652 = vmatpush.bf16.msra.mxu0 0
        %653 = vmatpush.bf16.msra.mxu0 0
        %654 = vmatpush.bf16.msra.mxu0 0
        %655 = vmatpush.bf16.msra.mxu0 0
        %656 = vmatpush.bf16.msra.mxu0 0
        %657 = vmatpush.bf16.msra.mxu0 %v648
        %658 = vmatmul.bf16.gmra.mxu0 %v644
        %v659 = vpop.f32.mrf.mxu0
        %v660 = vadd.f32 0.0, %v659
        %v661 = vpop.f32.mrf.mxu0
        %662 = vdwg.mxu0
        %v663 = vrcp.pop %v639
        %v664 = vmul.f32 %v639, %v663
        %v665 = vsub.f32 1.0, %v664
        %v666 = vmul.f32 %v663, %v665
        %v667 = vadd.f32 %v663, %v666
        %vm668 = vweird.f32 %v639
        %vm669 = vweird.f32 %v663
        %vm670 = vmor %vm668, %vm669
        %v671 = vsel %vm670, %v663, %v667
        %v672 = vand.u32 2147483647, %v639
        %vm673 = vcmp.eq.f32.partialorder %v672, 8.507059e+37
        %v674 = vand.u32 %v639, 2147483648
        %v675 = vor.u32 1.1754944e-38, %v674
        %v676 = vsel %vm673, %v675, %v671
        %v677 = vmul.f32 %v660, %v676
        %678 = vst.msk [vmem:[#allocation2] sm:$0xff] %vm611, %v677
        %679 = vrot.lane.b32.xlu0 %v608, 120
        %v680 = vpop.permute.xlu0 %679
        %681 = vrot.lane.b32.xlu0 %v608, 88
        %v682 = vpop.permute.xlu0 %681
        %v684 = vsel %vm611, %v680, 0
        %v687 = vsel %vm611, %v682, 0
        %689 = vmatpush.bf16.xpose.msra.mxu0 0
        %690 = vmatpush.bf16.xpose.msra.mxu0 0
        %691 = vmatpush.bf16.xpose.msra.mxu0 0
        %692 = vmatpush.bf16.xpose.msra.mxu0 0
        %693 = vmatpush.bf16.xpose.msra.mxu0 0
        %694 = vmatpush.bf16.xpose.msra.mxu0 0
        %695 = vmatpush.bf16.xpose.msra.mxu0 0
        %696 = vmatpush.bf16.xpose.msra.mxu0 %v687
        %697 = vmatmul.bf16.gmra.mxu0 %v684
        %v698 = vpop.f32.mrf.mxu0
        %v699 = vadd.f32 %v604, %v698
        %v700 = vpop.f32.mrf.mxu0
        %701 = vdwg.mxu0
        %v702 = vsel %vm611, %v699, -inf
        %703 = vmax.xlane.f32.xlu0 %v702
        %v704 = vpop.xlane.xlu0 %703
        %v705 = vsub.f32 %v699, %v704
        %v706 = vmul.f32 %v705, 1.442695
        %v707 = vpow.pop %v706
        %v708 = vsel %vm611, %v707, 0.0
        %709 = vadd.xlane.f32.xlu0 %v708
        %v710 = vpop.xlane.xlu0 %709
        %v711 = vpack.c.bf16 %v707, %v707
        %712 = vrot.lane.b32.xlu0 %v608, 56
        %v713 = vpop.permute.xlu0 %712
        %v715 = vsel %vm611, %v711, 0
        %v718 = vsel %vm646, %v713, 0
        %720 = vmatpush.bf16.msra.mxu0 0
        %721 = vmatpush.bf16.msra.mxu0 0
        %722 = vmatpush.bf16.msra.mxu0 0
        %723 = vmatpush.bf16.msra.mxu0 0
        %724 = vmatpush.bf16.msra.mxu0 0
        %725 = vmatpush.bf16.msra.mxu0 0
        %726 = vmatpush.bf16.msra.mxu0 0
        %727 = vmatpush.bf16.msra.mxu0 %v718
        %728 = vmatmul.bf16.gmra.mxu0 %v715
        %v729 = vpop.f32.mrf.mxu0
        %v730 = vadd.f32 0.0, %v729
        %v731 = vpop.f32.mrf.mxu0
        %732 = vdwg.mxu0
        %v733 = vrcp.pop %v710
        %v734 = vmul.f32 %v710, %v733
        %v735 = vsub.f32 1.0, %v734
        %v736 = vmul.f32 %v733, %v735
        %v737 = vadd.f32 %v733, %v736
        %vm738 = vweird.f32 %v710
        %vm739 = vweird.f32 %v733
        %vm740 = vmor %vm738, %vm739
        %v741 = vsel %vm740, %v733, %v737
        %v742 = vand.u32 2147483647, %v710
        %vm743 = vcmp.eq.f32.partialorder %v742, 8.507059e+37
        %v744 = vand.u32 %v710, 2147483648
        %v745 = vor.u32 1.1754944e-38, %v744
        %v746 = vsel %vm743, %v745, %v741
        %v747 = vmul.f32 %v730, %v746
        %749 = vrot.lane.b32.xlu0 %v747, 8
        %v750 = vpop.permute.xlu0 %749
        %vm752 = vcmask 130112
        %753 = vst.msk [vmem:[#allocation2] sm:$0xff] %vm752, %v750
        %754 = vrot.lane.b32.xlu0 %v608, 112
        %v755 = vpop.permute.xlu0 %754
        %756 = vrot.lane.b32.xlu0 %v608, 80
        %v757 = vpop.permute.xlu0 %756
        %v759 = vsel %vm611, %v755, 0
        %v762 = vsel %vm611, %v757, 0
        %764 = vmatpush.bf16.xpose.msra.mxu0 0
        %765 = vmatpush.bf16.xpose.msra.mxu0 0
        %766 = vmatpush.bf16.xpose.msra.mxu0 0
        %767 = vmatpush.bf16.xpose.msra.mxu0 0
        %768 = vmatpush.bf16.xpose.msra.mxu0 0
        %769 = vmatpush.bf16.xpose.msra.mxu0 0
        %770 = vmatpush.bf16.xpose.msra.mxu0 0
        %771 = vmatpush.bf16.xpose.msra.mxu0 %v762
        %772 = vmatmul.bf16.gmra.mxu0 %v759
        %v773 = vpop.f32.mrf.mxu0
        %v774 = vadd.f32 %v604, %v773
        %v775 = vpop.f32.mrf.mxu0
        %776 = vdwg.mxu0
        %v777 = vsel %vm611, %v774, -inf
        %778 = vmax.xlane.f32.xlu0 %v777
        %v779 = vpop.xlane.xlu0 %778
        %v780 = vsub.f32 %v774, %v779
        %v781 = vmul.f32 %v780, 1.442695
        %v782 = vpow.pop %v781
        %v783 = vsel %vm611, %v782, 0.0
        %784 = vadd.xlane.f32.xlu0 %v783
        %v785 = vpop.xlane.xlu0 %784
        %v786 = vpack.c.bf16 %v782, %v782
        %787 = vrot.lane.b32.xlu0 %v608, 48
        %v788 = vpop.permute.xlu0 %787
        %v790 = vsel %vm611, %v786, 0
        %v793 = vsel %vm646, %v788, 0
        %795 = vmatpush.bf16.msra.mxu0 0
        %796 = vmatpush.bf16.msra.mxu0 0
        %797 = vmatpush.bf16.msra.mxu0 0
        %798 = vmatpush.bf16.msra.mxu0 0
        %799 = vmatpush.bf16.msra.mxu0 0
        %800 = vmatpush.bf16.msra.mxu0 0
        %801 = vmatpush.bf16.msra.mxu0 0
        %802 = vmatpush.bf16.msra.mxu0 %v793
        %803 = vmatmul.bf16.gmra.mxu0 %v790
        %v804 = vpop.f32.mrf.mxu0
        %v805 = vadd.f32 0.0, %v804
        %v806 = vpop.f32.mrf.mxu0
        %807 = vdwg.mxu0
        %v808 = vrcp.pop %v785
        %v809 = vmul.f32 %v785, %v808
        %v810 = vsub.f32 1.0, %v809
        %v811 = vmul.f32 %v808, %v810
        %v812 = vadd.f32 %v808, %v811
        %vm813 = vweird.f32 %v785
        %vm814 = vweird.f32 %v808
        %vm815 = vmor %vm813, %vm814
        %v816 = vsel %vm815, %v808, %v812
        %v817 = vand.u32 2147483647, %v785
        %vm818 = vcmp.eq.f32.partialorder %v817, 8.507059e+37
        %v819 = vand.u32 %v785, 2147483648
        %v820 = vor.u32 1.1754944e-38, %v819
        %v821 = vsel %vm818, %v820, %v816
        %v822 = vmul.f32 %v805, %v821
        %824 = vrot.lane.b32.xlu0 %v822, 16
        %v825 = vpop.permute.xlu0 %824
        %vm827 = vcmask 195712
        %828 = vst.msk [vmem:[#allocation2] sm:$0xff] %vm827, %v825
        %829 = vrot.lane.b32.xlu0 %v608, 104
        %v830 = vpop.permute.xlu0 %829
        %831 = vrot.lane.b32.xlu0 %v608, 72
        %v832 = vpop.permute.xlu0 %831
        %v834 = vsel %vm611, %v830, 0
        %v837 = vsel %vm611, %v832, 0
        %839 = vmatpush.bf16.xpose.msra.mxu0 0
        %840 = vmatpush.bf16.xpose.msra.mxu0 0
        %841 = vmatpush.bf16.xpose.msra.mxu0 0
        %842 = vmatpush.bf16.xpose.msra.mxu0 0
        %843 = vmatpush.bf16.xpose.msra.mxu0 0
        %844 = vmatpush.bf16.xpose.msra.mxu0 0
        %845 = vmatpush.bf16.xpose.msra.mxu0 0
        %846 = vmatpush.bf16.xpose.msra.mxu0 %v837
        %847 = vmatmul.bf16.gmra.mxu0 %v834
        %v848 = vpop.f32.mrf.mxu0
        %v849 = vadd.f32 %v604, %v848
        %v850 = vpop.f32.mrf.mxu0
        %851 = vdwg.mxu0
        %v852 = vsel %vm611, %v849, -inf
        %853 = vmax.xlane.f32.xlu0 %v852
        %v854 = vpop.xlane.xlu0 %853
        %v855 = vsub.f32 %v849, %v854
        %v856 = vmul.f32 %v855, 1.442695
        %v857 = vpow.pop %v856
        %v858 = vsel %vm611, %v857, 0.0
        %859 = vadd.xlane.f32.xlu0 %v858
        %v860 = vpop.xlane.xlu0 %859
        %v861 = vpack.c.bf16 %v857, %v857
        %862 = vrot.lane.b32.xlu0 %v608, 40
        %v863 = vpop.permute.xlu0 %862
        %v865 = vsel %vm611, %v861, 0
        %v868 = vsel %vm646, %v863, 0
        %870 = vmatpush.bf16.msra.mxu0 0
        %871 = vmatpush.bf16.msra.mxu0 0
        %872 = vmatpush.bf16.msra.mxu0 0
        %873 = vmatpush.bf16.msra.mxu0 0
        %874 = vmatpush.bf16.msra.mxu0 0
        %875 = vmatpush.bf16.msra.mxu0 0
        %876 = vmatpush.bf16.msra.mxu0 0
        %877 = vmatpush.bf16.msra.mxu0 %v868
        %878 = vmatmul.bf16.gmra.mxu0 %v865
        %v879 = vpop.f32.mrf.mxu0
        %v880 = vadd.f32 0.0, %v879
        %v881 = vpop.f32.mrf.mxu0
        %882 = vdwg.mxu0
        %v883 = vrcp.pop %v860
        %v884 = vmul.f32 %v860, %v883
        %v885 = vsub.f32 1.0, %v884
        %v886 = vmul.f32 %v883, %v885
        %v887 = vadd.f32 %v883, %v886
        %vm888 = vweird.f32 %v860
        %vm889 = vweird.f32 %v883
        %vm890 = vmor %vm888, %vm889
        %v891 = vsel %vm890, %v883, %v887
        %v892 = vand.u32 2147483647, %v860
        %vm893 = vcmp.eq.f32.partialorder %v892, 8.507059e+37
        %v894 = vand.u32 %v860, 2147483648
        %v895 = vor.u32 1.1754944e-38, %v894
        %v896 = vsel %vm893, %v895, %v891
        %v897 = vmul.f32 %v880, %v896
        %899 = vrot.lane.b32.xlu0 %v897, 24
        %v900 = vpop.permute.xlu0 %899
        %vm902 = vcmask 261312
        %903 = vst.msk [vmem:[#allocation2] sm:$0xff] %vm902, %v900
        %v904 = vld [vmem:[#allocation2] sm:$0xff]
        %v905 = vpack.c.bf16 %v904, %v904
        %v906 = vld [vmem:[%s5] sm:$0xf]
        %v907 = vld [vmem:[%s5 + $0x4] sm:$0xf]
        %v908 = vld [vmem:[%s5 + $0x8] sm:$0xf]
        %v909 = vld [vmem:[%s5 + $0xc] sm:$0xf]
        %v910 = vld [vmem:[%s6] sm:$0x1]
        %v912 = vperm.slane %v910, 0
        %v918 = vunpack.c.l.b16 %v906
        %v919 = vunpack.c.l.b16 %v907
        %v920 = vunpack.c.l.b16 %v908
        %v921 = vunpack.c.l.b16 %v909
        %v922 = vpack.c.b16 %v919, %v918
        %v923 = vpack.c.b16 %v921, %v920
        %v927 = vsel %vm582, %v905, 0
        %929 = vmatpush.bf16.msra.mxu0 0
        %930 = vmatpush.bf16.msra.mxu0 0
        %931 = vmatpush.bf16.msra.mxu0 0
        %932 = vmatpush.bf16.msra.mxu0 0
        %933 = vmatpush.bf16.msra.mxu0 0
        %934 = vmatpush.bf16.msra.mxu0 0
        %935 = vmatpush.bf16.msra.mxu0 %v923
        %936 = vmatpush.bf16.msra.mxu0 %v922
        %937 = vmatmul.bf16.gmra.mxu0 %v927
        %v938 = vpop.f32.mrf.mxu0
        %v939 = vadd.f32 %v912, %v938
        %v940 = vpop.f32.mrf.mxu0
        %941 = vdwg.mxu0
        %v942 = vadd.f32 %v560, %v939
        %v943 = vld [vmem:[%s7] sm:$0x1]
        %v944 = vld [vmem:[%s8] sm:$0x1]
        %v945 = vsel %vm582, %v942, 0.0
        %946 = vadd.xlane.f32.xlu0 %v945
        %v947 = vpop.xlane.xlu0 %946
        %v948 = vrcp.pop 32.0
        %v949 = vmul.f32 32.0, %v948
        %v950 = vsub.f32 1.0, %v949
        %v951 = vmul.f32 %v948, %v950
        %v952 = vadd.f32 %v948, %v951
        %vm953 = vweird.f32 %v948
        %v954 = vsel %vm953, %v948, %v952
        %v955 = vmul.f32 %v947, %v954
        %v956 = vsub.f32 %v942, %v955
        %v957 = vmul.f32 %v956, %v956
        %v958 = vsel %vm582, %v957, 0.0
        %959 = vadd.xlane.f32.xlu0 %v958
        %v960 = vpop.xlane.xlu0 %959
        %v961 = vmul.f32 %v960, %v954
        %v962 = vadd.f32 %v961, 1e-05
        %v963 = vrsqrt.pop %v962
        %v964 = vmul.f32 %v963, %v962
        %v965 = vmul.f32 %v964, %v963
        %v966 = vmul.f32 0.5, %v965
        %v967 = vsub.f32 1.5, %v966
        %v968 = vmul.f32 %v963, %v967
        %vm969 = vweird.f32 %v962
        %vm970 = vweird.f32 %v963
        %vm971 = vmor %vm969, %vm970
        %v972 = vsel %vm971, %v963, %v968
        %v973 = vmul.f32 %v956, %v972
        %v975 = vperm.slane %v943, 0
        %v977 = vmul.f32 %v973, %v975
        %v979 = vperm.slane %v944, 0
        %v981 = vadd.f32 %v977, %v979
        %v982 = vpack.c.bf16 %v981, %v981
        %v983 = vld [vmem:[#allocation8] sm:$0xf]
        %v984 = vld [vmem:[#allocation8 + $0x4] sm:$0xf]
        %v985 = vld [vmem:[#allocation8 + $0x8] sm:$0xf]
        %v986 = vld [vmem:[#allocation8 + $0xc] sm:$0xf]
        %v987 = vld [vmem:[%s10] sm:$0x1]
        %v989 = vperm.slane %v987, 0
        %v995 = vunpack.c.l.b16 %v983
        %v996 = vunpack.c.l.b16 %v984
        %v997 = vunpack.c.l.b16 %v985
        %v998 = vunpack.c.l.b16 %v986
        %v999 = vpack.c.b16 %v996, %v995
        %v1000 = vpack.c.b16 %v998, %v997
        %v1004 = vsel %vm582, %v982, 0
        %1006 = vmatpush.bf16.msra.mxu0 0
        %1007 = vmatpush.bf16.msra.mxu0 0
        %1008 = vmatpush.bf16.msra.mxu0 0
        %1009 = vmatpush.bf16.msra.mxu0 0
        %1010 = vmatpush.bf16.msra.mxu0 0
        %1011 = vmatpush.bf16.msra.mxu0 0
        %1012 = vmatpush.bf16.msra.mxu0 %v1000
        %1013 = vmatpush.bf16.msra.mxu0 %v999
        %1014 = vmatmul.bf16.gmra.mxu0 %v1004
        %v1015 = vpop.f32.mrf.mxu0
        %v1016 = vadd.f32 %v989, %v1015
        %v1017 = vpop.f32.mrf.mxu0
        %1018 = vdwg.mxu0
        %v1019 = vmax.f32 %v1016, 0.0
        %v1020 = vpack.c.bf16 %v1019, %v1019
        %v1021 = vld [vmem:[%s11] sm:$0xf]
        %v1022 = vld [vmem:[%s11 + $0x4] sm:$0xf]
        %v1023 = vld [vmem:[%s11 + $0x8] sm:$0xf]
        %v1024 = vld [vmem:[%s11 + $0xc] sm:$0xf]
        %v1025 = vld [vmem:[%s11 + $0x10] sm:$0xf]
        %v1026 = vld [vmem:[%s11 + $0x14] sm:$0xf]
        %v1027 = vld [vmem:[%s11 + $0x18] sm:$0xf]
        %v1028 = vld [vmem:[%s11 + $0x1c] sm:$0xf]
        %v1029 = vld [vmem:[%s12] sm:$0x1]
        %v1031 = vperm.slane %v1029, 0
        %v1041 = vunpack.c.l.b16 %v1021
        %v1042 = vunpack.c.l.b16 %v1022
        %v1043 = vunpack.c.l.b16 %v1023
        %v1044 = vunpack.c.l.b16 %v1024
        %v1045 = vunpack.c.l.b16 %v1025
        %v1046 = vunpack.c.l.b16 %v1026
        %v1047 = vunpack.c.l.b16 %v1027
        %v1048 = vunpack.c.l.b16 %v1028
        %v1049 = vpack.c.b16 %v1042, %v1041
        %v1050 = vpack.c.b16 %v1044, %v1043
        %v1051 = vpack.c.b16 %v1046, %v1045
        %v1052 = vpack.c.b16 %v1048, %v1047
        %vm1057 = vcmask 523264
        %v1059 = vsel %vm1057, %v1020, 0
        %1061 = vmatpush.bf16.msra.mxu0 0
        %1062 = vmatpush.bf16.msra.mxu0 0
        %1063 = vmatpush.bf16.msra.mxu0 0
        %1064 = vmatpush.bf16.msra.mxu0 0
        %1065 = vmatpush.bf16.msra.mxu0 %v1052
        %1066 = vmatpush.bf16.msra.mxu0 %v1051
        %1067 = vmatpush.bf16.msra.mxu0 %v1050
        %1068 = vmatpush.bf16.msra.mxu0 %v1049
        %1069 = vmatmul.bf16.gmra.mxu0 %v1059
        %v1070 = vpop.f32.mrf.mxu0
        %v1071 = vadd.f32 %v1031, %v1070
        %v1072 = vpop.f32.mrf.mxu0
        %1073 = vdwg.mxu0
        %v1074 = vadd.f32 %v981, %v1071
        %v1075 = vld [vmem:[%s13] sm:$0x1]
        %v1076 = vld [vmem:[%s14] sm:$0x1]
        %v1077 = vsel %vm582, %v1074, 0.0
        %1078 = vadd.xlane.f32.xlu0 %v1077
        %v1079 = vpop.xlane.xlu0 %1078
        %v1080 = vmul.f32 %v1079, %v954
        %v1081 = vsub.f32 %v1074, %v1080
        %v1082 = vmul.f32 %v1081, %v1081
        %v1083 = vsel %vm582, %v1082, 0.0
        %1084 = vadd.xlane.f32.xlu0 %v1083
        %v1085 = vpop.xlane.xlu0 %1084
        %v1086 = vmul.f32 %v1085, %v954
        %v1087 = vadd.f32 %v1086, 1e-05
        %v1088 = vrsqrt.pop %v1087
        %v1089 = vmul.f32 %v1088, %v1087
        %v1090 = vmul.f32 %v1089, %v1088
        %v1091 = vmul.f32 0.5, %v1090
        %v1092 = vsub.f32 1.5, %v1091
        %v1093 = vmul.f32 %v1088, %v1092
        %vm1094 = vweird.f32 %v1087
        %vm1095 = vweird.f32 %v1088
        %vm1096 = vmor %vm1094, %vm1095
        %v1097 = vsel %vm1096, %v1088, %v1093
        %v1098 = vmul.f32 %v1081, %v1097
        %v1100 = vperm.slane %v1075, 0
        %v1102 = vmul.f32 %v1098, %v1100
        %v1104 = vperm.slane %v1076, 0
        %v1106 = vadd.f32 %v1102, %v1104
        %1107 = vst.msk [vmem:[%s551] sm:$0xff] %vm582, %v1106
        %s1108 = sand.u32 %s366, 1
        %s1109 = scalar_lea.sflag [#allocation5], %s1108
        %s1110 = sand.u32 %s366, 1
        %s1111 = smul.addr %s1110, 8
        %s1112 = scalar_lea.vmem [#allocation9], %s1111
        // Predicated region
        $region93: #{tpu_custom_call.1} parent=79 // pred_check
          %p1113 = pneg %p376
        $region94: #{tpu_custom_call.1} parent=79 // pred_check_branch
          %1115 = sbr.rel (%p1113) target = $region96
        $region95: #{tpu_custom_call.1} parent=79 // pred_region
          %1117 = vsyncadd %s1109, 0
          %s1118 = smul.addr %s33, 8
          %s1119 = scalar_lea.hbm %s15, %s1118
          %s1121 = sshll.u32 %s1112, 4
          %s1122 = int_to_ptr.vmem [resolvable:$true] %s1121
          %s1123 = sshll.u32 %s1119, 4
          %s1124 = int_to_ptr.hbm [resolvable:$true] %s1123
          %1126 = dma.vmem_to_hbm [thread:$0]  %s1122, 128, %s1124, %s1109
        $region96: #{tpu_custom_call.1} parent=79 // pred_fallthru
          _
      $region80: #{tpu_custom_call.1} parent=5 // pred_fallthru
        _
      %p1127 = scmp.le.s32.totalorder 2, %s28
      // Predicated region
      $region97: #{tpu_custom_call.1} parent=5 // pred_check
        %p1128 = pneg %p1127
      $region98: #{tpu_custom_call.1} parent=5 // pred_check_branch
        %1130 = sbr.rel (%p1128) target = $region100
      $region99: #{tpu_custom_call.1} parent=5 // pred_region
        %s1131 = ssub.s32 %s28, 2
        // Predicated region
        $region101: #{tpu_custom_call.1} parent=99 // pred_check
          %p1132 = pneg %p382
        $region102: #{tpu_custom_call.1} parent=99 // pred_check_branch
          %1134 = sbr.rel (%p1132) target = $region104
        $region103: #{tpu_custom_call.1} parent=99 // pred_region
          %s1135 = sand.u32 %s367, 1
          %s1136 = scalar_lea.sflag [#allocation5], %s1135
          %s1137 = sand.u32 %s367, 1
          %s1138 = smul.addr %s1137, 8
          %s1139 = scalar_lea.vmem [#allocation9], %s1138
          %1141 = dma.done %s1136, 128
        $region104: #{tpu_custom_call.1} parent=99 // pred_fallthru
          _
      $region100: #{tpu_custom_call.1} parent=5 // pred_fallthru
        _
    $region6: #{tpu_custom_call.1} parent=1 // loop_footer
      %s32 = sadd.s32 1, %s28
    $region7: #{tpu_custom_call.1} parent=1 // loop_footer_branch
      %27 = sbr.rel target = $region3
    $region8: #{tpu_custom_call.1} parent=1 // loop_exit
      _
    %1142 = vsyncpa [#allocation4], 1
    %s1143 = scalar_lea.sflag [#allocation4], 1
    %1144 = vsyncpa %s1143, 1
    %1145 = vsyncpa [#allocation7], 1
    %1146 = vsyncpa [#allocation5], 1
    %s1147 = scalar_lea.sflag [#allocation5], 1
    %1148 = vsyncpa %s1147, 1

</llo_original>
